<compile_context>
chip_gen: v7x
topology: tpu7x:2x2x1
jax: 0.10.0
libtpu: 0.0.40
codegen_flags: <defaults>
</compile_context>

<pallas_src>
import jax
import jax.numpy as jnp
from jax.experimental import pallas as pl
from jax.experimental.pallas import tpu as pltpu

_LANE = 128


def _round_up(x, m):
    return ((x + m - 1) // m) * m


def residual_block_kernel(x_ref, vec_ref, w1_ref, w2_ref, w3_ref, o_ref):
    """One (Cin, tn) spatial tile, channels on sublanes / pixels on lanes.

    x_ref  : (Cin, tn)   activations (any float dtype; compute in f32)
    vec_ref: (Cmax, 8)   packed per-channel vectors:
                         col0=s1, col1=b1, col2=b2', col3=b3', col4=c3
    w1_ref : (Cb, Cin)   conv1 weight with BN2 scale folded in
    w2_ref : (Cb, Cb)    conv2 weight with BN3 scale folded in
    w3_ref : (Cout, Cb)  conv3 weight
    """
    cin = x_ref.shape[0]
    cb = w1_ref.shape[0]
    cout = w3_ref.shape[0]

    s1 = vec_ref[0:cin, 0:1]
    b1 = vec_ref[0:cin, 1:2]
    b2 = vec_ref[0:cb, 2:3]
    b3 = vec_ref[0:cb, 3:4]
    c3 = vec_ref[0:cout, 4:5]

    hp = jax.lax.Precision.HIGHEST

    # nl1 + relu, then conv1 (+ folded BN2 scale) + folded (conv1 bias, BN2 shift) + relu
    h = jnp.maximum(x_ref[...].astype(jnp.float32) * s1 + b1, 0.0)
    h = jnp.maximum(
        jnp.dot(w1_ref[...], h, preferred_element_type=jnp.float32, precision=hp) + b2, 0.0)
    # conv2 (kernel_size=1 in the reference) with folded BN3 scale, shift, relu
    h = jnp.maximum(
        jnp.dot(w2_ref[...], h, preferred_element_type=jnp.float32, precision=hp) + b3, 0.0)
    # conv3 + bias
    h = jnp.dot(w3_ref[...], h, preferred_element_type=jnp.float32, precision=hp) + c3

    # residual add (re-load x from VMEM rather than carrying it in vregs) + relu
    o_ref[...] = jnp.maximum(h + x_ref[...].astype(jnp.float32), 0.0).astype(o_ref.dtype)


def _fold_bn(gamma, beta, mean, var, eps=1e-5):
    scale = gamma / jnp.sqrt(var + eps)
    shift = beta - mean * scale
    return scale, shift


def _vmem_limit_bytes():
    try:
        phys = pltpu.get_tpu_info().vmem_capacity_bytes
    except Exception:
        phys = 64 << 20  # assume the smallest (v7x) if the query is unavailable
    return int(min(phys * 3 // 4, 100 << 20))


def _choose_tn(cin, hw, n_batch, vmem_limit, itemsize):
    """Pick the spatial tile width (lanes)."""
    hw128 = _round_up(hw, _LANE)
    # Target ~4 MiB per x block to amortize the ~0.35 us per-grid-step overhead.
    tn = max(_LANE, (4 << 20) // (itemsize * cin))
    # VMEM cap: double-buffered x + out (4 blocks) plus ~3 block-sized temporaries,
    # kept under half the explicit vmem limit for headroom (v7x has only 64 MiB).
    tn = min(tn, max(_LANE, (vmem_limit // 2) // (7 * 4 * cin)))
    # Never exceed the (128-rounded) spatial extent.
    tn = min(tn, hw128)
    # Guarantee >= 2 grid steps when N == 1 so both v7x TensorCores get work.
    if n_batch == 1 and hw128 > _LANE:
        tn = min(tn, max(_LANE, _round_up(hw128 // 2, _LANE)))
    tn = max(_LANE, (tn // _LANE) * _LANE)
    # Balance block sizes so the ragged last block wastes <128 lanes per batch.
    nblk = -(-hw128 // tn)
    tn = _round_up(-(-hw128 // nblk), _LANE)
    return tn


def residual_block_pallas(x_nchw, params, *, tn=None):
    """x_nchw: (N, Cin, H, W) float. Returns (N, Cin, H, W) in x's dtype."""
    N, Cin, H, W = x_nchw.shape
    HW = H * W

    s1, b1 = _fold_bn(*params["nl1"])
    s2, b2 = _fold_bn(*params["nl2"])
    s3, b3 = _fold_bn(*params["nl3"])

    # Conv2d weight (out, in, 1, 1) -> (out, in); applied as W @ x in-kernel.
    w1 = params["conv1_w"][:, :, 0, 0]
    w2 = params["conv2_w"][:, :, 0, 0]
    w3 = params["conv3_w"][:, :, 0, 0].astype(jnp.float32)
    c1 = params["conv1_b"]
    c2 = params["conv2_b"]
    c3 = params["conv3_b"]

    Cb = w1.shape[0]
    Cout = w3.shape[0]
    assert Cout == Cin, "identity residual requires planes == inplanes"
    # TODO(synk): stride>1 / downsample path not implemented (default ctor path only).

    # Exact algebraic folds: BN2/BN3 scale into conv1/conv2 weights,
    # conv1/conv2 biases into the following BN shifts.
    w1p = (s2[:, None] * w1).astype(jnp.float32)
    w2p = (s3[:, None] * w2).astype(jnp.float32)
    b2p = s2 * c1 + b2
    b3p = s3 * c2 + b3

    # Pack all per-channel vectors into one small (Cmax, 8) operand.
    Cmax = max(Cin, Cb, Cout)
    vec = jnp.zeros((Cmax, 8), jnp.float32)
    vec = vec.at[:Cin, 0].set(s1.astype(jnp.float32))
    vec = vec.at[:Cin, 1].set(b1.astype(jnp.float32))
    vec = vec.at[:Cb, 2].set(b2p.astype(jnp.float32))
    vec = vec.at[:Cb, 3].set(b3p.astype(jnp.float32))
    vec = vec.at[:Cout, 4].set(c3.astype(jnp.float32))

    itemsize = jnp.dtype(x_nchw.dtype).itemsize
    vmem_limit = _vmem_limit_bytes()
    if tn is None:
        tn = _choose_tn(Cin, HW, N, vmem_limit, itemsize)
    else:
        tn = max(_LANE, _round_up(int(tn), _LANE))
    grid = (N, pl.cdiv(HW, tn))

    # Native NCHW layout: flatten spatial onto the lane axis (free reshape, no
    # transpose, no pad).  Ragged last spatial block handled by Pallas masking.
    x3 = x_nchw.reshape(N, Cin, HW)

    flops = 2 * N * HW * (Cin * Cb + Cb * Cb + Cb * Cout)
    bytes_accessed = (x3.size + N * Cout * HW) * itemsize \
        + 4 * (w1p.size + w2p.size + w3.size + vec.size)

    out3 = pl.pallas_call(
        residual_block_kernel,
        out_shape=jax.ShapeDtypeStruct((N, Cout, HW), x_nchw.dtype),
        grid_spec=pltpu.PrefetchScalarGridSpec(
            num_scalar_prefetch=0,
            grid=grid,
            in_specs=[
                pl.BlockSpec((None, Cin, tn), lambda n, j: (n, 0, j)),  # x tile
                pl.BlockSpec((Cmax, 8), lambda n, j: (0, 0)),           # packed vectors
                pl.BlockSpec((Cb, Cin), lambda n, j: (0, 0)),           # w1'
                pl.BlockSpec((Cb, Cb), lambda n, j: (0, 0)),            # w2'
                pl.BlockSpec((Cout, Cb), lambda n, j: (0, 0)),          # w3
            ],
            out_specs=pl.BlockSpec((None, Cout, tn), lambda n, j: (n, 0, j)),
        ),
        compiler_params=pltpu.CompilerParams(
            dimension_semantics=("parallel", "parallel"),
            vmem_limit_bytes=vmem_limit),
        cost_estimate=pl.CostEstimate(
            flops=flops, transcendentals=0, bytes_accessed=bytes_accessed),
    )(x3, vec, w1p, w2p, w3)

    return out3.reshape(N, Cout, H, W)


def residual_block_reference(x_nchw, params):
    """Pure-JAX reference (straightforward per-pixel channel matmuls, fp32)."""
    N, Cin, H, W = x_nchw.shape
    hp = jax.lax.Precision.HIGHEST
    x2d = jnp.transpose(x_nchw, (0, 2, 3, 1)).reshape(-1, Cin).astype(jnp.float32)
    s1, b1 = _fold_bn(*params["nl1"])
    s2, b2 = _fold_bn(*params["nl2"])
    s3, b3 = _fold_bn(*params["nl3"])
    w1 = params["conv1_w"][:, :, 0, 0].T
    w2 = params["conv2_w"][:, :, 0, 0].T
    w3 = params["conv3_w"][:, :, 0, 0].T
    h = jnp.dot(jnp.maximum(x2d * s1 + b1, 0.0), w1, precision=hp) + params["conv1_b"]
    h = jnp.dot(jnp.maximum(h * s2 + b2, 0.0), w2, precision=hp) + params["conv2_b"]
    h = jnp.dot(jnp.maximum(h * s3 + b3, 0.0), w3, precision=hp) + params["conv3_b"]
    out = jnp.maximum(h + x2d, 0.0)
    return jnp.transpose(out.reshape(N, H, W, -1), (0, 3, 1, 2)).astype(x_nchw.dtype)


def make_params(key, inplanes, planes):
    bottleneck = planes // 4
    ks = jax.random.split(key, 18)

    def bn(k0, k1, k2, k3, c):
        gamma = 1.0 + 0.1 * jax.random.normal(k0, (c,), jnp.float32)
        beta = 0.1 * jax.random.normal(k1, (c,), jnp.float32)
        mean = 0.05 * jax.random.normal(k2, (c,), jnp.float32)
        var = jnp.abs(1.0 + 0.1 * jax.random.normal(k3, (c,), jnp.float32))
        return (gamma, beta, mean, var)

    return {
        "nl1": bn(ks[0], ks[1], ks[2], ks[3], inplanes),
        "conv1_w": 0.1 * jax.random.normal(ks[4], (bottleneck, inplanes, 1, 1), jnp.float32),
        "conv1_b": 0.05 * jax.random.normal(ks[5], (bottleneck,), jnp.float32),
        "nl2": bn(ks[6], ks[7], ks[8], ks[9], bottleneck),
        "conv2_w": 0.1 * jax.random.normal(ks[10], (bottleneck, bottleneck, 1, 1), jnp.float32),
        "conv2_b": 0.05 * jax.random.normal(ks[11], (bottleneck,), jnp.float32),
        "nl3": bn(ks[12], ks[13], ks[14], ks[15], bottleneck),
        "conv3_w": 0.1 * jax.random.normal(ks[16], (planes, bottleneck, 1, 1), jnp.float32),
        "conv3_b": 0.05 * jax.random.normal(ks[17], (planes,), jnp.float32),
    }


if __name__ == "__main__":
    key = jax.random.PRNGKey(0)
    k_x, k_p = jax.random.split(key)

    N, C, H, W = 2, 32, 16, 16          # inplanes = planes = 32, bottleneck = 8
    x = jax.random.normal(k_x, (N, C, H, W), jnp.float32)
    params = make_params(k_p, inplanes=C, planes=C)

    out = jax.block_until_ready(residual_block_pallas(x, params))
    ref = residual_block_reference(x, params)

    assert out.shape == x.shape
    assert jnp.allclose(out, ref, atol=1e-5, rtol=1e-5), "mismatch vs JAX reference"

    print("KERNEL_OK")
</pallas_src>

<mosaic_0001>
module attributes {stable_mosaic.version = 11 : i64} {
  func.func @residual_block_kernel(%arg0: i32, %arg1: i32, %arg2: memref<1x32x256xf32, #tpu.memory_space<vmem>>, %arg3: memref<32x8xf32, #tpu.memory_space<vmem>>, %arg4: memref<8x32xf32, #tpu.memory_space<vmem>>, %arg5: memref<8x8xf32, #tpu.memory_space<vmem>>, %arg6: memref<32x8xf32, #tpu.memory_space<vmem>>, %arg7: memref<1x32x256xf32, #tpu.memory_space<vmem>>) attributes {dimension_semantics = [#tpu.dimension_semantics<parallel>, #tpu.dimension_semantics<parallel>], iteration_bounds = array<i64: 2, 1>, scalar_prefetch = 0 : i64, scratch_operands = 0 : i64, tpu.core_type = #tpu.core_type<tc>, window_params = [{transform_indices = @transform_0, window_bounds = array<i64: 1, 32, 256>}, {pipeline_mode = #tpu.pipeline_mode<synchronous>, transform_indices = @transform_1, window_bounds = array<i64: 32, 8>}, {pipeline_mode = #tpu.pipeline_mode<synchronous>, transform_indices = @transform_2, window_bounds = array<i64: 8, 32>}, {pipeline_mode = #tpu.pipeline_mode<synchronous>, transform_indices = @transform_3, window_bounds = array<i64: 8, 8>}, {pipeline_mode = #tpu.pipeline_mode<synchronous>, transform_indices = @transform_4, window_bounds = array<i64: 32, 8>}, {transform_indices = @transform_5, window_bounds = array<i64: 1, 32, 256>}]} {
    %c0 = arith.constant 0 : index
    %c0_0 = arith.constant 0 : index
    %0 = vector.load %arg3[%c0, %c0_0] : memref<32x8xf32, #tpu.memory_space<vmem>>, vector<32x1xf32>
    %c0_1 = arith.constant 0 : index
    %c1 = arith.constant 1 : index
    %1 = vector.load %arg3[%c0_1, %c1] : memref<32x8xf32, #tpu.memory_space<vmem>>, vector<32x1xf32>
    %c0_2 = arith.constant 0 : index
    %c2 = arith.constant 2 : index
    %2 = vector.load %arg3[%c0_2, %c2] : memref<32x8xf32, #tpu.memory_space<vmem>>, vector<8x1xf32>
    %c0_3 = arith.constant 0 : index
    %c3 = arith.constant 3 : index
    %3 = vector.load %arg3[%c0_3, %c3] : memref<32x8xf32, #tpu.memory_space<vmem>>, vector<8x1xf32>
    %c0_4 = arith.constant 0 : index
    %c4 = arith.constant 4 : index
    %4 = vector.load %arg3[%c0_4, %c4] : memref<32x8xf32, #tpu.memory_space<vmem>>, vector<32x1xf32>
    %c0_5 = arith.constant 0 : index
    %c0_6 = arith.constant 0 : index
    %c0_7 = arith.constant 0 : index
    %5 = vector.load %arg2[%c0_5, %c0_6, %c0_7] : memref<1x32x256xf32, #tpu.memory_space<vmem>>, vector<1x32x256xf32>
    %6 = vector.shape_cast %5 : vector<1x32x256xf32> to vector<32x256xf32>
    %7 = vector.broadcast %0 : vector<32x1xf32> to vector<32x256xf32>
    %8 = arith.mulf %6, %7 : vector<32x256xf32>
    %9 = vector.broadcast %1 : vector<32x1xf32> to vector<32x256xf32>
    %10 = arith.addf %8, %9 : vector<32x256xf32>
    %cst = arith.constant 0.000000e+00 : f32
    %11 = vector.broadcast %cst : f32 to vector<32x256xf32>
    %12 = arith.maximumf %10, %11 : vector<32x256xf32>
    %c0_8 = arith.constant 0 : index
    %c0_9 = arith.constant 0 : index
    %13 = vector.load %arg4[%c0_8, %c0_9] : memref<8x32xf32, #tpu.memory_space<vmem>>, vector<8x32xf32>
    %cst_10 = arith.constant dense<0.000000e+00> : vector<8x256xf32>
    %14 = tpu.matmul %13, %12, %cst_10 {dimension_numbers = #tpu.dot_dimension_numbers<[1], [0], [0], [1], [0, 0, 1, 1], [], []>, precision = #tpu.contract_precision<fp32>} : vector<8x32xf32>, vector<32x256xf32>, vector<8x256xf32> -> vector<8x256xf32>
    %15 = vector.broadcast %2 : vector<8x1xf32> to vector<8x256xf32>
    %16 = arith.addf %14, %15 : vector<8x256xf32>
    %cst_11 = arith.constant 0.000000e+00 : f32
    %17 = vector.broadcast %cst_11 : f32 to vector<8x256xf32>
    %18 = arith.maximumf %16, %17 : vector<8x256xf32>
    %c0_12 = arith.constant 0 : index
    %c0_13 = arith.constant 0 : index
    %19 = vector.load %arg5[%c0_12, %c0_13] : memref<8x8xf32, #tpu.memory_space<vmem>>, vector<8x8xf32>
    %cst_14 = arith.constant dense<0.000000e+00> : vector<8x256xf32>
    %20 = tpu.matmul %19, %18, %cst_14 {dimension_numbers = #tpu.dot_dimension_numbers<[1], [0], [0], [1], [0, 0, 1, 1], [], []>, precision = #tpu.contract_precision<fp32>} : vector<8x8xf32>, vector<8x256xf32>, vector<8x256xf32> -> vector<8x256xf32>
    %21 = vector.broadcast %3 : vector<8x1xf32> to vector<8x256xf32>
    %22 = arith.addf %20, %21 : vector<8x256xf32>
    %cst_15 = arith.constant 0.000000e+00 : f32
    %23 = vector.broadcast %cst_15 : f32 to vector<8x256xf32>
    %24 = arith.maximumf %22, %23 : vector<8x256xf32>
    %c0_16 = arith.constant 0 : index
    %c0_17 = arith.constant 0 : index
    %25 = vector.load %arg6[%c0_16, %c0_17] : memref<32x8xf32, #tpu.memory_space<vmem>>, vector<32x8xf32>
    %cst_18 = arith.constant dense<0.000000e+00> : vector<32x256xf32>
    %26 = tpu.matmul %25, %24, %cst_18 {dimension_numbers = #tpu.dot_dimension_numbers<[1], [0], [0], [1], [0, 0, 1, 1], [], []>, precision = #tpu.contract_precision<fp32>} : vector<32x8xf32>, vector<8x256xf32>, vector<32x256xf32> -> vector<32x256xf32>
    %27 = vector.broadcast %4 : vector<32x1xf32> to vector<32x256xf32>
    %28 = arith.addf %26, %27 : vector<32x256xf32>
    %c0_19 = arith.constant 0 : index
    %c0_20 = arith.constant 0 : index
    %c0_21 = arith.constant 0 : index
    %29 = vector.load %arg2[%c0_19, %c0_20, %c0_21] : memref<1x32x256xf32, #tpu.memory_space<vmem>>, vector<1x32x256xf32>
    %30 = vector.shape_cast %29 : vector<1x32x256xf32> to vector<32x256xf32>
    %31 = arith.addf %28, %30 : vector<32x256xf32>
    %cst_22 = arith.constant 0.000000e+00 : f32
    %32 = vector.broadcast %cst_22 : f32 to vector<32x256xf32>
    %33 = arith.maximumf %31, %32 : vector<32x256xf32>
    %c0_23 = arith.constant 0 : index
    %c0_24 = arith.constant 0 : index
    %c0_25 = arith.constant 0 : index
    %34 = vector.load %arg7[%c0_23, %c0_24, %c0_25] : memref<1x32x256xf32, #tpu.memory_space<vmem>>, vector<1x32x256xf32>
    %35 = vector.shape_cast %34 : vector<1x32x256xf32> to vector<32x256xf32>
    %36 = vector.shape_cast %33 : vector<32x256xf32> to vector<1x32x256xf32>
    tpu.vector_store %arg7[%c0_23, %c0_24, %c0_25], %36 {strides = array<i32>} : memref<1x32x256xf32, #tpu.memory_space<vmem>>, vector<1x32x256xf32>,
    return
  }
  func.func @transform_0(%arg0: i32, %arg1: i32) -> (i32, i32, i32) {
    %c0_i32 = arith.constant 0 : i32
    %c0_i32_0 = arith.constant 0 : i32
    return %arg0, %c0_i32, %arg1 : i32, i32, i32
  }
  func.func @transform_1(%arg0: i32, %arg1: i32) -> (i32, i32) {
    %c0_i32 = arith.constant 0 : i32
    %c0_i32_0 = arith.constant 0 : i32
    %c0_i32_1 = arith.constant 0 : i32
    return %c0_i32, %c0_i32_0 : i32, i32
  }
  func.func @transform_2(%arg0: i32, %arg1: i32) -> (i32, i32) {
    %c0_i32 = arith.constant 0 : i32
    %c0_i32_0 = arith.constant 0 : i32
    %c0_i32_1 = arith.constant 0 : i32
    return %c0_i32, %c0_i32_0 : i32, i32
  }
  func.func @transform_3(%arg0: i32, %arg1: i32) -> (i32, i32) {
    %c0_i32 = arith.constant 0 : i32
    %c0_i32_0 = arith.constant 0 : i32
    %c0_i32_1 = arith.constant 0 : i32
    return %c0_i32, %c0_i32_0 : i32, i32
  }
  func.func @transform_4(%arg0: i32, %arg1: i32) -> (i32, i32) {
    %c0_i32 = arith.constant 0 : i32
    %c0_i32_0 = arith.constant 0 : i32
    %c0_i32_1 = arith.constant 0 : i32
    return %c0_i32, %c0_i32_0 : i32, i32
  }
  func.func @transform_5(%arg0: i32, %arg1: i32) -> (i32, i32, i32) {
    %c0_i32 = arith.constant 0 : i32
    %c0_i32_0 = arith.constant 0 : i32
    return %arg0, %c0_i32, %arg1 : i32, i32, i32
  }
}

</mosaic_0001>

<llo_original>
// kernel: tpu_custom_call.1
$region0: #{tpu_custom_call.1}
  #allocation0 [shape = 'u32[]', space=smem, size = 0x4, offset = 0x4, fixed_abs, tag = 'smem constant byte address 0x4 - core index']
  #allocation1 [shape = 'u32[144,128]{1,0:T(1,128)}', space=vmem, size = 0x12000, scoped, tag = 'internal scratch']
  %s0 = inlined_call_operand.hbm [shape: f32[2,32,256], index: 0, kind: input, shape index: {}]
  %s1 = inlined_call_operand.vmem [shape: f32[32,8], index: 1, kind: input, shape index: {}]
  %s2 = inlined_call_operand.vmem [shape: f32[8,32], index: 2, kind: input, shape index: {}]
  %s3 = inlined_call_operand.vmem [shape: f32[8,8], index: 3, kind: input, shape index: {}]
  %s4 = inlined_call_operand.vmem [shape: f32[32,8], index: 4, kind: input, shape index: {}]
  %s5 = inlined_call_operand.hbm [shape: f32[2,32,256], index: 5, kind: output, shape index: {}]
  %s6 = sld [smem:[#allocation0]]
  $region57: #{tpu_custom_call.1} parent=0
    _
  %s8 = ssub.s32 1, %s6
  %s9 = scalar_select 0, %s8, %s6
  $region1: #{tpu_custom_call.1} parent=0
    #allocation2 [shape = 'u8[65536]{0}', space=vmem, size = 0x10000, scoped, tag = 'input window, operand 0']
    #allocation3 [shape = 's32[2]{0}', space=sflag, size = 0x8, scoped, tag = 'scoped memory for tpu_custom_call.1']
    #allocation4 [shape = 's32[2]{0}', space=sflag, size = 0x8, scoped, tag = 'scoped memory for tpu_custom_call.1']
    #allocation5 [shape = 'u8[65536]{0}', space=vmem, size = 0x10000, scoped, tag = 'output window, operand 0']
    %10 = vsyncpa [#allocation3], 0
    %s11 = scalar_lea.sflag [#allocation3], 1
    %12 = vsyncpa %s11, 0
    %13 = vsyncpa [#allocation4], 0
    %s14 = scalar_lea.sflag [#allocation4], 1
    %15 = vsyncpa %s14, 0
    loop: start=0, step=1, limit=4
    $region2: #{tpu_custom_call.1} parent=1 // loop_pre_header
      _
    $region3: #{tpu_custom_call.1} parent=1 // loop_header
      %s17 = sphi 0, %s21
      %p18 = scmp.ge.s32.totalorder %s17, 4
      %s24 = sphi 0, %s36
      %s25 = sphi 0, %s32
      %s26 = sphi 0, %s24
      %s27 = sphi 0, %s25
      %s28 = sphi 0, %s26
      %s29 = sphi 0, %s27
      %s41 = sphi 0, %s43
      %s44 = sphi 0, %s41
      %s45 = sphi 0, %s44
      %s61 = sphi 0, %s45
      %s65 = sphi 0, %s65
      %s67 = sphi 0, %s65
      %s68 = sphi 0, %s67
      %s82 = sphi 0, %s68
      %s86 = sphi 0, %s86
      %s88 = sphi 0, %s86
      %s89 = sphi 0, %s88
      %s103 = sphi 0, %s89
      %s107 = sphi 0, %s107
      %s109 = sphi 0, %s107
      %s110 = sphi 0, %s109
      %s124 = sphi 0, %s110
      %s128 = sphi 0, %s128
      %s130 = sphi 0, %s128
      %s131 = sphi 0, %s130
      %s145 = sphi 0, %s131
      %s153 = sphi 0, %s155
      %s156 = sphi 0, %s153
      %s157 = sphi 0, %s156
      %s173 = sphi 0, %s157
    $region4: #{tpu_custom_call.1} parent=1 // loop_header_branch
      %20 = sbr.rel (%p18) target = $region8
    $region5: #{tpu_custom_call.1} parent=1 // loop_body
      %s22 = ssub.s32 %s17, 1
      %s23 = ssub.s32 %s17, 2
      %s30 = sadd.s32 1, %s25
      %p31 = scmp.ge.s32.totalorder %s30, 1
      %s32 = scalar_select %p31, 0, %s30
      %s33 = sadd.s32 1, %s24
      %s34 = scalar_select %p31, %s33, %s24
      %p35 = scmp.ge.s32.totalorder %s34, 2
      %s36 = scalar_select %p35, 0, %s34
      %s37 = ssub.s32 %s24, %s36
      %s38 = ssub.s32 %s25, %s32
      %s39 = sor.u32 %s37, %s38
      %p40 = scmp.eq.s32.totalorder %s39, 0
      %s42 = sadd.s32 %s41, 1
      %s43 = scalar_select %p40, %s41, %s42
      %p46 = pneg %p40
      %p47 = scmp.eq.s32.totalorder %s17, 1
      %p48 = por %p46, %p47
      %p49 = scmp.ne.s32.totalorder %s41, %s44
      %p50 = scmp.eq.s32.totalorder %s17, 0
      %p51 = por %p49, %p50
      %p52 = scmp.ne.s32.totalorder %s41, %s44
      %p53 = scmp.eq.s32.totalorder %s22, 1
      %p54 = por %p52, %p53
      %p55 = scmp.ne.s32.totalorder %s44, %s45
      %p56 = scmp.eq.s32.totalorder %s22, 0
      %p57 = por %p55, %p56
      %p58 = scmp.ne.s32.totalorder %s44, %s45
      %p59 = scmp.eq.s32.totalorder %s23, 1
      %p60 = por %p58, %p59
      %p62 = scmp.ne.s32.totalorder %s45, %s61
      %p63 = scmp.eq.s32.totalorder %s23, 0
      %p64 = por %p62, %p63
      %s66 = sadd.s32 %s65, 1
      %p69 = scmp.eq.s32.totalorder %s17, 1
      %p70 = scmp.ne.s32.totalorder %s65, %s67
      %p71 = scmp.eq.s32.totalorder %s17, 0
      %p72 = por %p70, %p71
      %p73 = scmp.ne.s32.totalorder %s65, %s67
      %p74 = scmp.eq.s32.totalorder %s22, 1
      %p75 = por %p73, %p74
      %p76 = scmp.ne.s32.totalorder %s67, %s68
      %p77 = scmp.eq.s32.totalorder %s22, 0
      %p78 = por %p76, %p77
      %p79 = scmp.ne.s32.totalorder %s67, %s68
      %p80 = scmp.eq.s32.totalorder %s23, 1
      %p81 = por %p79, %p80
      %p83 = scmp.ne.s32.totalorder %s68, %s82
      %p84 = scmp.eq.s32.totalorder %s23, 0
      %p85 = por %p83, %p84
      %s87 = sadd.s32 %s86, 1
      %p90 = scmp.eq.s32.totalorder %s17, 1
      %p91 = scmp.ne.s32.totalorder %s86, %s88
      %p92 = scmp.eq.s32.totalorder %s17, 0
      %p93 = por %p91, %p92
      %p94 = scmp.ne.s32.totalorder %s86, %s88
      %p95 = scmp.eq.s32.totalorder %s22, 1
      %p96 = por %p94, %p95
      %p97 = scmp.ne.s32.totalorder %s88, %s89
      %p98 = scmp.eq.s32.totalorder %s22, 0
      %p99 = por %p97, %p98
      %p100 = scmp.ne.s32.totalorder %s88, %s89
      %p101 = scmp.eq.s32.totalorder %s23, 1
      %p102 = por %p100, %p101
      %p104 = scmp.ne.s32.totalorder %s89, %s103
      %p105 = scmp.eq.s32.totalorder %s23, 0
      %p106 = por %p104, %p105
      %s108 = sadd.s32 %s107, 1
      %p111 = scmp.eq.s32.totalorder %s17, 1
      %p112 = scmp.ne.s32.totalorder %s107, %s109
      %p113 = scmp.eq.s32.totalorder %s17, 0
      %p114 = por %p112, %p113
      %p115 = scmp.ne.s32.totalorder %s107, %s109
      %p116 = scmp.eq.s32.totalorder %s22, 1
      %p117 = por %p115, %p116
      %p118 = scmp.ne.s32.totalorder %s109, %s110
      %p119 = scmp.eq.s32.totalorder %s22, 0
      %p120 = por %p118, %p119
      %p121 = scmp.ne.s32.totalorder %s109, %s110
      %p122 = scmp.eq.s32.totalorder %s23, 1
      %p123 = por %p121, %p122
      %p125 = scmp.ne.s32.totalorder %s110, %s124
      %p126 = scmp.eq.s32.totalorder %s23, 0
      %p127 = por %p125, %p126
      %s129 = sadd.s32 %s128, 1
      %p132 = scmp.eq.s32.totalorder %s17, 1
      %p133 = scmp.ne.s32.totalorder %s128, %s130
      %p134 = scmp.eq.s32.totalorder %s17, 0
      %p135 = por %p133, %p134
      %p136 = scmp.ne.s32.totalorder %s128, %s130
      %p137 = scmp.eq.s32.totalorder %s22, 1
      %p138 = por %p136, %p137
      %p139 = scmp.ne.s32.totalorder %s130, %s131
      %p140 = scmp.eq.s32.totalorder %s22, 0
      %p141 = por %p139, %p140
      %p142 = scmp.ne.s32.totalorder %s130, %s131
      %p143 = scmp.eq.s32.totalorder %s23, 1
      %p144 = por %p142, %p143
      %p146 = scmp.ne.s32.totalorder %s131, %s145
      %p147 = scmp.eq.s32.totalorder %s23, 0
      %p148 = por %p146, %p147
      %s149 = ssub.s32 %s24, %s36
      %s150 = ssub.s32 %s25, %s32
      %s151 = sor.u32 %s149, %s150
      %p152 = scmp.eq.s32.totalorder %s151, 0
      %s154 = sadd.s32 %s153, 1
      %s155 = scalar_select %p152, %s153, %s154
      %p158 = pneg %p152
      %p159 = scmp.eq.s32.totalorder %s17, 1
      %p160 = por %p158, %p159
      %p161 = scmp.ne.s32.totalorder %s153, %s156
      %p162 = scmp.eq.s32.totalorder %s17, 0
      %p163 = por %p161, %p162
      %p164 = scmp.ne.s32.totalorder %s153, %s156
      %p165 = scmp.eq.s32.totalorder %s22, 1
      %p166 = por %p164, %p165
      %p167 = scmp.ne.s32.totalorder %s156, %s157
      %p168 = scmp.eq.s32.totalorder %s22, 0
      %p169 = por %p167, %p168
      %p170 = scmp.ne.s32.totalorder %s156, %s157
      %p171 = scmp.eq.s32.totalorder %s23, 1
      %p172 = por %p170, %p171
      %p174 = scmp.ne.s32.totalorder %s157, %s173
      %p175 = scmp.eq.s32.totalorder %s23, 0
      %p176 = por %p174, %p175
      %p177 = scmp.le.s32.totalorder 1, %s17
      %p178 = scmp.lt.s32.totalorder %s17, 3
      %p179 = pnand %p177, %p178
      %p180 = pneg %p179
      // Predicated region
      $region9: #{tpu_custom_call.1} parent=5 // pred_check
        _
      $region10: #{tpu_custom_call.1} parent=5 // pred_check_branch
        %182 = sbr.rel (%p179) target = $region12
      $region11: #{tpu_custom_call.1} parent=5 // pred_region
        %s183 = ssub.s32 %s17, 1
        // Predicated region
        $region13: #{tpu_custom_call.1} parent=11 // pred_check
          %p184 = pneg %p78
        $region14: #{tpu_custom_call.1} parent=11 // pred_check_branch
          %186 = sbr.rel (%p184) target = $region16
        $region15: #{tpu_custom_call.1} parent=11 // pred_region
          _
        $region16: #{tpu_custom_call.1} parent=11 // pred_fallthru
          _
        // Predicated region
        $region17: #{tpu_custom_call.1} parent=11 // pred_check
          %p187 = pneg %p99
        $region18: #{tpu_custom_call.1} parent=11 // pred_check_branch
          %189 = sbr.rel (%p187) target = $region20
        $region19: #{tpu_custom_call.1} parent=11 // pred_region
          _
        $region20: #{tpu_custom_call.1} parent=11 // pred_fallthru
          _
        // Predicated region
        $region21: #{tpu_custom_call.1} parent=11 // pred_check
          %p190 = pneg %p120
        $region22: #{tpu_custom_call.1} parent=11 // pred_check_branch
          %192 = sbr.rel (%p190) target = $region24
        $region23: #{tpu_custom_call.1} parent=11 // pred_region
          _
        $region24: #{tpu_custom_call.1} parent=11 // pred_fallthru
          _
        // Predicated region
        $region25: #{tpu_custom_call.1} parent=11 // pred_check
          %p193 = pneg %p141
        $region26: #{tpu_custom_call.1} parent=11 // pred_check_branch
          %195 = sbr.rel (%p193) target = $region28
        $region27: #{tpu_custom_call.1} parent=11 // pred_region
          _
        $region28: #{tpu_custom_call.1} parent=11 // pred_fallthru
          _
      $region12: #{tpu_custom_call.1} parent=5 // pred_fallthru
        _
      %p196 = scmp.lt.s32.totalorder %s17, 2
      // Predicated region
      $region29: #{tpu_custom_call.1} parent=5 // pred_check
        %p197 = pneg %p196
      $region30: #{tpu_custom_call.1} parent=5 // pred_check_branch
        %199 = sbr.rel (%p197) target = $region32
      $region31: #{tpu_custom_call.1} parent=5 // pred_region
        // Predicated region
        $region33: #{tpu_custom_call.1} parent=31 // pred_check
          %p200 = pneg %p51
        $region34: #{tpu_custom_call.1} parent=31 // pred_check_branch
          %202 = sbr.rel (%p200) target = $region36
        $region35: #{tpu_custom_call.1} parent=31 // pred_region
          %s203 = sand.u32 %s41, 1
          %s204 = scalar_lea.sflag [#allocation3], %s203
          %s205 = sand.u32 %s41, 1
          %s206 = smul.addr %s205, 64
          %s207 = scalar_lea.vmem [#allocation2], %s206
          %s208 = smul.u32 2, %s25
          %s210 = ssub.s32 1024, 1024
          %211 = vsyncadd %s204, %s210
          %s212 = smul.addr %s24, 8
          %s213 = sadd.s32 %s208, %s212
          %s214 = smul.addr %s213, 128
          %s215 = scalar_lea.hbm %s0, %s214
          %s216 = sshll.u32 %s207, 4
          %s217 = int_to_ptr.vmem [resolvable:$true] %s216
          %222 = dma.hbm_to_vmem [thread:$0]  %s215, 1024, %s217, %s204, 256, 256, 16
        $region36: #{tpu_custom_call.1} parent=31 // pred_fallthru
          _
      $region32: #{tpu_custom_call.1} parent=5 // pred_fallthru
        _
      %p223 = scmp.le.s32.totalorder 1, %s17
      %p224 = scmp.lt.s32.totalorder %s17, 3
      %p225 = pnand %p223, %p224
      %p226 = pneg %p225
      // Predicated region
      $region37: #{tpu_custom_call.1} parent=5 // pred_check
        _
      $region38: #{tpu_custom_call.1} parent=5 // pred_check_branch
        %228 = sbr.rel (%p225) target = $region40
      $region39: #{tpu_custom_call.1} parent=5 // pred_region
        %s229 = ssub.s32 %s17, 1
        %s230 = sand.u32 %s44, 1
        %s231 = scalar_lea.sflag [#allocation3], %s230
        %s232 = sand.u32 %s44, 1
        %s233 = smul.addr %s232, 64
        %s234 = scalar_lea.vmem [#allocation2], %s233
        // Predicated region
        $region41: #{tpu_custom_call.1} parent=39 // pred_check
          %p235 = pneg %p57
        $region42: #{tpu_custom_call.1} parent=39 // pred_check_branch
          %237 = sbr.rel (%p235) target = $region44
        $region43: #{tpu_custom_call.1} parent=39 // pred_region
          %238 = dma.done %s231, 1024
        $region44: #{tpu_custom_call.1} parent=39 // pred_fallthru
          _
        %s239 = sand.u32 %s44, 1
        %s240 = scalar_lea.sflag [#allocation3], %s239
        %s241 = sand.u32 %s44, 1
        %s242 = smul.addr %s241, 64
        %s243 = scalar_lea.vmem [#allocation2], %s242
        %p244 = pneg %p57
        %p245 = pneg %p54
        %p246 = pneg %p78
        %p247 = pneg %p75
        %p248 = pneg %p99
        %p249 = pneg %p96
        %p250 = pneg %p120
        %p251 = pneg %p117
        %p252 = pneg %p141
        %p253 = pneg %p138
        %p254 = pneg %p169
        %p255 = pneg %p166
        %s256 = sand.u32 %s156, 1
        %s257 = scalar_lea.sflag [#allocation4], %s256
        %s258 = sand.u32 %s156, 1
        %s259 = smul.addr %s258, 64
        %s260 = scalar_lea.vmem [#allocation5], %s259
        %s261 = smul.u32 2, %s27
        %s262 = smul.u32 2, %s27
        %v263 = vld [vmem:[%s1] sm:$0xff]
        %v264 = vld [vmem:[%s1 + $0x8] sm:$0xff]
        %v265 = vld [vmem:[%s1 + $0x10] sm:$0xff]
        %v266 = vld [vmem:[%s1 + $0x18] sm:$0xff]
        %v267 = vld [vmem:[%s234] sm:$0xff]
        %v268 = vld [vmem:[%s234 + $0x8] sm:$0xff]
        %v269 = vld [vmem:[%s234 + $0x10] sm:$0xff]
        %v270 = vld [vmem:[%s234 + $0x18] sm:$0xff]
        %v271 = vld [vmem:[%s234 + $0x20] sm:$0xff]
        %v272 = vld [vmem:[%s234 + $0x28] sm:$0xff]
        %v273 = vld [vmem:[%s234 + $0x30] sm:$0xff]
        %v274 = vld [vmem:[%s234 + $0x38] sm:$0xff]
        %276 = vset.pattern.permute.xlu0 0
        %277 = vperm.xlu0 %276, %v263
        %v278 = vpop.permute.xlu0 %277
        %281 = vset.pattern.permute.xlu0 0
        %282 = vperm.xlu0 %281, %v264
        %v283 = vpop.permute.xlu0 %282
        %286 = vset.pattern.permute.xlu0 0
        %287 = vperm.xlu0 %286, %v265
        %v288 = vpop.permute.xlu0 %287
        %291 = vset.pattern.permute.xlu0 0
        %292 = vperm.xlu0 %291, %v266
        %v293 = vpop.permute.xlu0 %292
        %v295 = vmul.f32 %v267, %v278
        %v296 = vmul.f32 %v268, %v278
        %v297 = vmul.f32 %v269, %v283
        %v298 = vmul.f32 %v270, %v283
        %v299 = vmul.f32 %v271, %v288
        %v300 = vmul.f32 %v272, %v288
        %v301 = vmul.f32 %v273, %v293
        %v302 = vmul.f32 %v274, %v293
        %303 = vset.pattern.permute.xlu0 1
        %304 = vperm.xlu0 %303, %v263
        %v305 = vpop.permute.xlu0 %304
        %307 = vset.pattern.permute.xlu0 1
        %308 = vperm.xlu0 %307, %v264
        %v309 = vpop.permute.xlu0 %308
        %311 = vset.pattern.permute.xlu0 1
        %312 = vperm.xlu0 %311, %v265
        %v313 = vpop.permute.xlu0 %312
        %315 = vset.pattern.permute.xlu0 1
        %316 = vperm.xlu0 %315, %v266
        %v317 = vpop.permute.xlu0 %316
        %v319 = vadd.f32 %v295, %v305
        %v320 = vadd.f32 %v296, %v305
        %v321 = vadd.f32 %v297, %v309
        %v322 = vadd.f32 %v298, %v309
        %v323 = vadd.f32 %v299, %v313
        %v324 = vadd.f32 %v300, %v313
        %v325 = vadd.f32 %v301, %v317
        %v326 = vadd.f32 %v302, %v317
        %v327 = vmax.f32 %v319, 0.0
        %v328 = vmax.f32 %v320, 0.0
        %v329 = vmax.f32 %v321, 0.0
        %v330 = vmax.f32 %v322, 0.0
        %v331 = vmax.f32 %v323, 0.0
        %v332 = vmax.f32 %v324, 0.0
        %v333 = vmax.f32 %v325, 0.0
        %v334 = vmax.f32 %v326, 0.0
        %v335 = vld [vmem:[%s2] sm:$0xff]
        %336 = vset.pattern.permute.xlu0 2
        %337 = vperm.xlu0 %336, %v263
        %v338 = vpop.permute.xlu0 %337
        %vm340 = vcmask 261120
        %v342 = vsel %vm340, %v335, 0
        %v344 = vand.u32 %v328, 4294901760
        %345 = vmatprep.subr.mxu0 %v344
        %v346 = vand.u32 %v327, 4294901760
        %347 = vmatpush1.msra.mxu0 %v346
        %v348 = vand.u32 %v330, 4294901760
        %349 = vmatprep.subr.mxu0 %v348
        %v350 = vand.u32 %v329, 4294901760
        %351 = vmatpush1.msra.mxu0 %v350
        %v352 = vand.u32 %v332, 4294901760
        %353 = vmatprep.subr.mxu0 %v352
        %v354 = vand.u32 %v331, 4294901760
        %355 = vmatpush1.msra.mxu0 %v354
        %v356 = vand.u32 %v334, 4294901760
        %357 = vmatprep.subr.mxu0 %v356
        %v358 = vand.u32 %v333, 4294901760
        %359 = vmatpush1.msra.mxu0 %v358
        %360 = vmatprep.subr.mxu0 0.0
        %361 = vmatpush1.msra.mxu0 0.0
        %362 = vmatprep.subr.mxu0 0.0
        %363 = vmatpush1.msra.mxu0 0.0
        %364 = vmatprep.subr.mxu0 0.0
        %365 = vmatpush1.msra.mxu0 0.0
        %366 = vmatprep.subr.mxu0 0.0
        %367 = vmatpush1.msra.mxu0 0.0
        %368 = vmatprep.subr.mxu0 0.0
        %369 = vmatpush1.msra.mxu0 0.0
        %370 = vmatprep.subr.mxu0 0.0
        %371 = vmatpush1.msra.mxu0 0.0
        %372 = vmatprep.subr.mxu0 0.0
        %373 = vmatpush1.msra.mxu0 0.0
        %374 = vmatprep.subr.mxu0 0.0
        %375 = vmatpush1.msra.mxu0 0.0
        %376 = vmatprep.subr.mxu0 0.0
        %377 = vmatpush1.msra.mxu0 0.0
        %378 = vmatprep.subr.mxu0 0.0
        %379 = vmatpush1.msra.mxu0 0.0
        %380 = vmatprep.subr.mxu0 0.0
        %381 = vmatpush1.msra.mxu0 0.0
        %382 = vmatprep.subr.mxu0 0.0
        %383 = vmatpush1.msra.mxu0 0.0
        %384 = vmatprep.subr.mxu0 0.0
        %385 = vmatpush1.msra.mxu0 0.0
        %386 = vmatprep.subr.mxu0 0.0
        %387 = vmatpush1.msra.mxu0 0.0
        %388 = vmatprep.subr.mxu0 0.0
        %389 = vmatpush1.msra.mxu0 0.0
        %390 = vmatprep.subr.mxu0 0.0
        %391 = vmatpush1.msra.mxu0 0.0
        %392 = vmatprep.subr.mxu0 0.0
        %393 = vmatpush1.msra.mxu0 0.0
        %394 = vmatprep.subr.mxu0 0.0
        %395 = vmatpush1.msra.mxu0 0.0
        %396 = vmatprep.subr.mxu0 0.0
        %397 = vmatpush1.msra.mxu0 0.0
        %398 = vmatprep.subr.mxu0 0.0
        %399 = vmatpush1.msra.mxu0 0.0
        %400 = vmatprep.subr.mxu0 0.0
        %401 = vmatpush1.msra.mxu0 0.0
        %402 = vmatprep.subr.mxu0 0.0
        %403 = vmatpush1.msra.mxu0 0.0
        %404 = vmatprep.subr.mxu0 0.0
        %405 = vmatpush1.msra.mxu0 0.0
        %406 = vmatprep.subr.mxu0 0.0
        %407 = vmatpush1.msra.mxu0 0.0
        %408 = vmatprep.subr.mxu0 0.0
        %409 = vmatpush1.msra.mxu0 0.0
        %410 = vmatprep.subr.mxu0 0.0
        %411 = vmatpush1.msra.mxu0 0.0
        %412 = vmatprep.subr.mxu0 0.0
        %413 = vmatpush1.msra.mxu0 0.0
        %414 = vmatprep.subr.mxu0 0.0
        %415 = vmatpush1.msra.mxu0 0.0
        %416 = vmatprep.mubr.f32.mxu0 0.0
        %v417 = vand.u32 %v342, 4294901760
        %v418 = vsub.f32 %v342, %v417
        %v419 = vand.u32 %v418, 4294901760
        %v420 = vsub.f32 %v418, %v419
        %v421 = vand.u32 %v420, 4294901760
        %422 = vmatmul.mubr.f32.gmra.mrb[0].mxu0 %v421
        %v423 = vpop.f32.mrb[0].mxu0
        %v424 = vadd.f32 %v338, %v423
        %v425 = vpop.f32.mrb[0].mxu0
        %v426 = vadd.f32 %v338, %v425
        %427 = vdwg.mxu0
        %v428 = vand.u32 %v328, 4294901760
        %v429 = vsub.f32 %v328, %v428
        %v430 = vand.u32 %v429, 4294901760
        %v431 = vsub.f32 %v429, %v430
        %v432 = vand.u32 %v431, 4294901760
        %433 = vmatprep.subr.mxu0 %v432
        %v434 = vand.u32 %v327, 4294901760
        %v435 = vsub.f32 %v327, %v434
        %v436 = vand.u32 %v435, 4294901760
        %v437 = vsub.f32 %v435, %v436
        %v438 = vand.u32 %v437, 4294901760
        %439 = vmatpush1.msra.mxu0 %v438
        %v440 = vand.u32 %v330, 4294901760
        %v441 = vsub.f32 %v330, %v440
        %v442 = vand.u32 %v441, 4294901760
        %v443 = vsub.f32 %v441, %v442
        %v444 = vand.u32 %v443, 4294901760
        %445 = vmatprep.subr.mxu0 %v444
        %v446 = vand.u32 %v329, 4294901760
        %v447 = vsub.f32 %v329, %v446
        %v448 = vand.u32 %v447, 4294901760
        %v449 = vsub.f32 %v447, %v448
        %v450 = vand.u32 %v449, 4294901760
        %451 = vmatpush1.msra.mxu0 %v450
        %v452 = vand.u32 %v332, 4294901760
        %v453 = vsub.f32 %v332, %v452
        %v454 = vand.u32 %v453, 4294901760
        %v455 = vsub.f32 %v453, %v454
        %v456 = vand.u32 %v455, 4294901760
        %457 = vmatprep.subr.mxu0 %v456
        %v458 = vand.u32 %v331, 4294901760
        %v459 = vsub.f32 %v331, %v458
        %v460 = vand.u32 %v459, 4294901760
        %v461 = vsub.f32 %v459, %v460
        %v462 = vand.u32 %v461, 4294901760
        %463 = vmatpush1.msra.mxu0 %v462
        %v464 = vand.u32 %v334, 4294901760
        %v465 = vsub.f32 %v334, %v464
        %v466 = vand.u32 %v465, 4294901760
        %v467 = vsub.f32 %v465, %v466
        %v468 = vand.u32 %v467, 4294901760
        %469 = vmatprep.subr.mxu0 %v468
        %v470 = vand.u32 %v333, 4294901760
        %v471 = vsub.f32 %v333, %v470
        %v472 = vand.u32 %v471, 4294901760
        %v473 = vsub.f32 %v471, %v472
        %v474 = vand.u32 %v473, 4294901760
        %475 = vmatpush1.msra.mxu0 %v474
        %476 = vmatprep.subr.mxu0 0.0
        %477 = vmatpush1.msra.mxu0 0.0
        %478 = vmatprep.subr.mxu0 0.0
        %479 = vmatpush1.msra.mxu0 0.0
        %480 = vmatprep.subr.mxu0 0.0
        %481 = vmatpush1.msra.mxu0 0.0
        %482 = vmatprep.subr.mxu0 0.0
        %483 = vmatpush1.msra.mxu0 0.0
        %484 = vmatprep.subr.mxu0 0.0
        %485 = vmatpush1.msra.mxu0 0.0
        %486 = vmatprep.subr.mxu0 0.0
        %487 = vmatpush1.msra.mxu0 0.0
        %488 = vmatprep.subr.mxu0 0.0
        %489 = vmatpush1.msra.mxu0 0.0
        %490 = vmatprep.subr.mxu0 0.0
        %491 = vmatpush1.msra.mxu0 0.0
        %492 = vmatprep.subr.mxu0 0.0
        %493 = vmatpush1.msra.mxu0 0.0
        %494 = vmatprep.subr.mxu0 0.0
        %495 = vmatpush1.msra.mxu0 0.0
        %496 = vmatprep.subr.mxu0 0.0
        %497 = vmatpush1.msra.mxu0 0.0
        %498 = vmatprep.subr.mxu0 0.0
        %499 = vmatpush1.msra.mxu0 0.0
        %500 = vmatprep.subr.mxu0 0.0
        %501 = vmatpush1.msra.mxu0 0.0
        %502 = vmatprep.subr.mxu0 0.0
        %503 = vmatpush1.msra.mxu0 0.0
        %504 = vmatprep.subr.mxu0 0.0
        %505 = vmatpush1.msra.mxu0 0.0
        %506 = vmatprep.subr.mxu0 0.0
        %507 = vmatpush1.msra.mxu0 0.0
        %508 = vmatprep.subr.mxu0 0.0
        %509 = vmatpush1.msra.mxu0 0.0
        %510 = vmatprep.subr.mxu0 0.0
        %511 = vmatpush1.msra.mxu0 0.0
        %512 = vmatprep.subr.mxu0 0.0
        %513 = vmatpush1.msra.mxu0 0.0
        %514 = vmatprep.subr.mxu0 0.0
        %515 = vmatpush1.msra.mxu0 0.0
        %516 = vmatprep.subr.mxu0 0.0
        %517 = vmatpush1.msra.mxu0 0.0
        %518 = vmatprep.subr.mxu0 0.0
        %519 = vmatpush1.msra.mxu0 0.0
        %520 = vmatprep.subr.mxu0 0.0
        %521 = vmatpush1.msra.mxu0 0.0
        %522 = vmatprep.subr.mxu0 0.0
        %523 = vmatpush1.msra.mxu0 0.0
        %524 = vmatprep.subr.mxu0 0.0
        %525 = vmatpush1.msra.mxu0 0.0
        %526 = vmatprep.subr.mxu0 0.0
        %527 = vmatpush1.msra.mxu0 0.0
        %528 = vmatprep.subr.mxu0 0.0
        %529 = vmatpush1.msra.mxu0 0.0
        %530 = vmatprep.subr.mxu0 0.0
        %531 = vmatpush1.msra.mxu0 0.0
        %532 = vmatprep.mubr.f32.mxu0 0.0
        %v533 = vand.u32 %v342, 4294901760
        %534 = vmatmul.mubr.f32.gmra.mrb[0].mxu0 %v533
        %v535 = vpop.f32.mrb[0].mxu0
        %v536 = vadd.f32 %v424, %v535
        %v537 = vpop.f32.mrb[0].mxu0
        %v538 = vadd.f32 %v426, %v537
        %539 = vdwg.mxu0
        %v540 = vand.u32 %v328, 4294901760
        %v541 = vsub.f32 %v328, %v540
        %542 = vmatprep.subr.mxu0 %v541
        %v543 = vand.u32 %v327, 4294901760
        %v544 = vsub.f32 %v327, %v543
        %545 = vmatpush1.msra.mxu0 %v544
        %v546 = vand.u32 %v330, 4294901760
        %v547 = vsub.f32 %v330, %v546
        %548 = vmatprep.subr.mxu0 %v547
        %v549 = vand.u32 %v329, 4294901760
        %v550 = vsub.f32 %v329, %v549
        %551 = vmatpush1.msra.mxu0 %v550
        %v552 = vand.u32 %v332, 4294901760
        %v553 = vsub.f32 %v332, %v552
        %554 = vmatprep.subr.mxu0 %v553
        %v555 = vand.u32 %v331, 4294901760
        %v556 = vsub.f32 %v331, %v555
        %557 = vmatpush1.msra.mxu0 %v556
        %v558 = vand.u32 %v334, 4294901760
        %v559 = vsub.f32 %v334, %v558
        %560 = vmatprep.subr.mxu0 %v559
        %v561 = vand.u32 %v333, 4294901760
        %v562 = vsub.f32 %v333, %v561
        %563 = vmatpush1.msra.mxu0 %v562
        %564 = vmatprep.subr.mxu0 0.0
        %565 = vmatpush1.msra.mxu0 0.0
        %566 = vmatprep.subr.mxu0 0.0
        %567 = vmatpush1.msra.mxu0 0.0
        %568 = vmatprep.subr.mxu0 0.0
        %569 = vmatpush1.msra.mxu0 0.0
        %570 = vmatprep.subr.mxu0 0.0
        %571 = vmatpush1.msra.mxu0 0.0
        %572 = vmatprep.subr.mxu0 0.0
        %573 = vmatpush1.msra.mxu0 0.0
        %574 = vmatprep.subr.mxu0 0.0
        %575 = vmatpush1.msra.mxu0 0.0
        %576 = vmatprep.subr.mxu0 0.0
        %577 = vmatpush1.msra.mxu0 0.0
        %578 = vmatprep.subr.mxu0 0.0
        %579 = vmatpush1.msra.mxu0 0.0
        %580 = vmatprep.subr.mxu0 0.0
        %581 = vmatpush1.msra.mxu0 0.0
        %582 = vmatprep.subr.mxu0 0.0
        %583 = vmatpush1.msra.mxu0 0.0
        %584 = vmatprep.subr.mxu0 0.0
        %585 = vmatpush1.msra.mxu0 0.0
        %586 = vmatprep.subr.mxu0 0.0
        %587 = vmatpush1.msra.mxu0 0.0
        %588 = vmatprep.subr.mxu0 0.0
        %589 = vmatpush1.msra.mxu0 0.0
        %590 = vmatprep.subr.mxu0 0.0
        %591 = vmatpush1.msra.mxu0 0.0
        %592 = vmatprep.subr.mxu0 0.0
        %593 = vmatpush1.msra.mxu0 0.0
        %594 = vmatprep.subr.mxu0 0.0
        %595 = vmatpush1.msra.mxu0 0.0
        %596 = vmatprep.subr.mxu0 0.0
        %597 = vmatpush1.msra.mxu0 0.0
        %598 = vmatprep.subr.mxu0 0.0
        %599 = vmatpush1.msra.mxu0 0.0
        %600 = vmatprep.subr.mxu0 0.0
        %601 = vmatpush1.msra.mxu0 0.0
        %602 = vmatprep.subr.mxu0 0.0
        %603 = vmatpush1.msra.mxu0 0.0
        %604 = vmatprep.subr.mxu0 0.0
        %605 = vmatpush1.msra.mxu0 0.0
        %606 = vmatprep.subr.mxu0 0.0
        %607 = vmatpush1.msra.mxu0 0.0
        %608 = vmatprep.subr.mxu0 0.0
        %609 = vmatpush1.msra.mxu0 0.0
        %610 = vmatprep.subr.mxu0 0.0
        %611 = vmatpush1.msra.mxu0 0.0
        %612 = vmatprep.subr.mxu0 0.0
        %613 = vmatpush1.msra.mxu0 0.0
        %614 = vmatprep.subr.mxu0 0.0
        %615 = vmatpush1.msra.mxu0 0.0
        %616 = vmatprep.subr.mxu0 0.0
        %617 = vmatpush1.msra.mxu0 0.0
        %618 = vmatprep.subr.mxu0 0.0
        %619 = vmatpush1.msra.mxu0 0.0
        %620 = vmatprep.mubr.f32.mxu0 0.0
        %v621 = vand.u32 %v342, 4294901760
        %v622 = vsub.f32 %v342, %v621
        %623 = vmatmul.mubr.f32.gmra.mrb[0].mxu0 %v622
        %v624 = vpop.f32.mrb[0].mxu0
        %v625 = vadd.f32 %v536, %v624
        %v626 = vpop.f32.mrb[0].mxu0
        %v627 = vadd.f32 %v538, %v626
        %628 = vdwg.mxu0
        %v629 = vand.u32 %v328, 4294901760
        %630 = vmatprep.subr.mxu0 %v629
        %v631 = vand.u32 %v327, 4294901760
        %632 = vmatpush1.msra.mxu0 %v631
        %v633 = vand.u32 %v330, 4294901760
        %634 = vmatprep.subr.mxu0 %v633
        %v635 = vand.u32 %v329, 4294901760
        %636 = vmatpush1.msra.mxu0 %v635
        %v637 = vand.u32 %v332, 4294901760
        %638 = vmatprep.subr.mxu0 %v637
        %v639 = vand.u32 %v331, 4294901760
        %640 = vmatpush1.msra.mxu0 %v639
        %v641 = vand.u32 %v334, 4294901760
        %642 = vmatprep.subr.mxu0 %v641
        %v643 = vand.u32 %v333, 4294901760
        %644 = vmatpush1.msra.mxu0 %v643
        %645 = vmatprep.subr.mxu0 0.0
        %646 = vmatpush1.msra.mxu0 0.0
        %647 = vmatprep.subr.mxu0 0.0
        %648 = vmatpush1.msra.mxu0 0.0
        %649 = vmatprep.subr.mxu0 0.0
        %650 = vmatpush1.msra.mxu0 0.0
        %651 = vmatprep.subr.mxu0 0.0
        %652 = vmatpush1.msra.mxu0 0.0
        %653 = vmatprep.subr.mxu0 0.0
        %654 = vmatpush1.msra.mxu0 0.0
        %655 = vmatprep.subr.mxu0 0.0
        %656 = vmatpush1.msra.mxu0 0.0
        %657 = vmatprep.subr.mxu0 0.0
        %658 = vmatpush1.msra.mxu0 0.0
        %659 = vmatprep.subr.mxu0 0.0
        %660 = vmatpush1.msra.mxu0 0.0
        %661 = vmatprep.subr.mxu0 0.0
        %662 = vmatpush1.msra.mxu0 0.0
        %663 = vmatprep.subr.mxu0 0.0
        %664 = vmatpush1.msra.mxu0 0.0
        %665 = vmatprep.subr.mxu0 0.0
        %666 = vmatpush1.msra.mxu0 0.0
        %667 = vmatprep.subr.mxu0 0.0
        %668 = vmatpush1.msra.mxu0 0.0
        %669 = vmatprep.subr.mxu0 0.0
        %670 = vmatpush1.msra.mxu0 0.0
        %671 = vmatprep.subr.mxu0 0.0
        %672 = vmatpush1.msra.mxu0 0.0
        %673 = vmatprep.subr.mxu0 0.0
        %674 = vmatpush1.msra.mxu0 0.0
        %675 = vmatprep.subr.mxu0 0.0
        %676 = vmatpush1.msra.mxu0 0.0
        %677 = vmatprep.subr.mxu0 0.0
        %678 = vmatpush1.msra.mxu0 0.0
        %679 = vmatprep.subr.mxu0 0.0
        %680 = vmatpush1.msra.mxu0 0.0
        %681 = vmatprep.subr.mxu0 0.0
        %682 = vmatpush1.msra.mxu0 0.0
        %683 = vmatprep.subr.mxu0 0.0
        %684 = vmatpush1.msra.mxu0 0.0
        %685 = vmatprep.subr.mxu0 0.0
        %686 = vmatpush1.msra.mxu0 0.0
        %687 = vmatprep.subr.mxu0 0.0
        %688 = vmatpush1.msra.mxu0 0.0
        %689 = vmatprep.subr.mxu0 0.0
        %690 = vmatpush1.msra.mxu0 0.0
        %691 = vmatprep.subr.mxu0 0.0
        %692 = vmatpush1.msra.mxu0 0.0
        %693 = vmatprep.subr.mxu0 0.0
        %694 = vmatpush1.msra.mxu0 0.0
        %695 = vmatprep.subr.mxu0 0.0
        %696 = vmatpush1.msra.mxu0 0.0
        %697 = vmatprep.subr.mxu0 0.0
        %698 = vmatpush1.msra.mxu0 0.0
        %699 = vmatprep.subr.mxu0 0.0
        %700 = vmatpush1.msra.mxu0 0.0
        %701 = vmatprep.mubr.f32.mxu0 0.0
        %v702 = vand.u32 %v342, 4294901760
        %v703 = vsub.f32 %v342, %v702
        %v704 = vand.u32 %v703, 4294901760
        %705 = vmatmul.mubr.f32.gmra.mrb[0].mxu0 %v704
        %v706 = vpop.f32.mrb[0].mxu0
        %v707 = vadd.f32 %v625, %v706
        %v708 = vpop.f32.mrb[0].mxu0
        %v709 = vadd.f32 %v627, %v708
        %710 = vdwg.mxu0
        %v711 = vand.u32 %v328, 4294901760
        %v712 = vsub.f32 %v328, %v711
        %v713 = vand.u32 %v712, 4294901760
        %714 = vmatprep.subr.mxu0 %v713
        %v715 = vand.u32 %v327, 4294901760
        %v716 = vsub.f32 %v327, %v715
        %v717 = vand.u32 %v716, 4294901760
        %718 = vmatpush1.msra.mxu0 %v717
        %v719 = vand.u32 %v330, 4294901760
        %v720 = vsub.f32 %v330, %v719
        %v721 = vand.u32 %v720, 4294901760
        %722 = vmatprep.subr.mxu0 %v721
        %v723 = vand.u32 %v329, 4294901760
        %v724 = vsub.f32 %v329, %v723
        %v725 = vand.u32 %v724, 4294901760
        %726 = vmatpush1.msra.mxu0 %v725
        %v727 = vand.u32 %v332, 4294901760
        %v728 = vsub.f32 %v332, %v727
        %v729 = vand.u32 %v728, 4294901760
        %730 = vmatprep.subr.mxu0 %v729
        %v731 = vand.u32 %v331, 4294901760
        %v732 = vsub.f32 %v331, %v731
        %v733 = vand.u32 %v732, 4294901760
        %734 = vmatpush1.msra.mxu0 %v733
        %v735 = vand.u32 %v334, 4294901760
        %v736 = vsub.f32 %v334, %v735
        %v737 = vand.u32 %v736, 4294901760
        %738 = vmatprep.subr.mxu0 %v737
        %v739 = vand.u32 %v333, 4294901760
        %v740 = vsub.f32 %v333, %v739
        %v741 = vand.u32 %v740, 4294901760
        %742 = vmatpush1.msra.mxu0 %v741
        %743 = vmatprep.subr.mxu0 0.0
        %744 = vmatpush1.msra.mxu0 0.0
        %745 = vmatprep.subr.mxu0 0.0
        %746 = vmatpush1.msra.mxu0 0.0
        %747 = vmatprep.subr.mxu0 0.0
        %748 = vmatpush1.msra.mxu0 0.0
        %749 = vmatprep.subr.mxu0 0.0
        %750 = vmatpush1.msra.mxu0 0.0
        %751 = vmatprep.subr.mxu0 0.0
        %752 = vmatpush1.msra.mxu0 0.0
        %753 = vmatprep.subr.mxu0 0.0
        %754 = vmatpush1.msra.mxu0 0.0
        %755 = vmatprep.subr.mxu0 0.0
        %756 = vmatpush1.msra.mxu0 0.0
        %757 = vmatprep.subr.mxu0 0.0
        %758 = vmatpush1.msra.mxu0 0.0
        %759 = vmatprep.subr.mxu0 0.0
        %760 = vmatpush1.msra.mxu0 0.0
        %761 = vmatprep.subr.mxu0 0.0
        %762 = vmatpush1.msra.mxu0 0.0
        %763 = vmatprep.subr.mxu0 0.0
        %764 = vmatpush1.msra.mxu0 0.0
        %765 = vmatprep.subr.mxu0 0.0
        %766 = vmatpush1.msra.mxu0 0.0
        %767 = vmatprep.subr.mxu0 0.0
        %768 = vmatpush1.msra.mxu0 0.0
        %769 = vmatprep.subr.mxu0 0.0
        %770 = vmatpush1.msra.mxu0 0.0
        %771 = vmatprep.subr.mxu0 0.0
        %772 = vmatpush1.msra.mxu0 0.0
        %773 = vmatprep.subr.mxu0 0.0
        %774 = vmatpush1.msra.mxu0 0.0
        %775 = vmatprep.subr.mxu0 0.0
        %776 = vmatpush1.msra.mxu0 0.0
        %777 = vmatprep.subr.mxu0 0.0
        %778 = vmatpush1.msra.mxu0 0.0
        %779 = vmatprep.subr.mxu0 0.0
        %780 = vmatpush1.msra.mxu0 0.0
        %781 = vmatprep.subr.mxu0 0.0
        %782 = vmatpush1.msra.mxu0 0.0
        %783 = vmatprep.subr.mxu0 0.0
        %784 = vmatpush1.msra.mxu0 0.0
        %785 = vmatprep.subr.mxu0 0.0
        %786 = vmatpush1.msra.mxu0 0.0
        %787 = vmatprep.subr.mxu0 0.0
        %788 = vmatpush1.msra.mxu0 0.0
        %789 = vmatprep.subr.mxu0 0.0
        %790 = vmatpush1.msra.mxu0 0.0
        %791 = vmatprep.subr.mxu0 0.0
        %792 = vmatpush1.msra.mxu0 0.0
        %793 = vmatprep.subr.mxu0 0.0
        %794 = vmatpush1.msra.mxu0 0.0
        %795 = vmatprep.subr.mxu0 0.0
        %796 = vmatpush1.msra.mxu0 0.0
        %797 = vmatprep.subr.mxu0 0.0
        %798 = vmatpush1.msra.mxu0 0.0
        %799 = vmatprep.mubr.f32.mxu0 0.0
        %v800 = vand.u32 %v342, 4294901760
        %801 = vmatmul.mubr.f32.gmra.mrb[0].mxu0 %v800
        %v802 = vpop.f32.mrb[0].mxu0
        %v803 = vadd.f32 %v707, %v802
        %v804 = vpop.f32.mrb[0].mxu0
        %v805 = vadd.f32 %v709, %v804
        %806 = vdwg.mxu0
        %v807 = vand.u32 %v328, 4294901760
        %808 = vmatprep.subr.mxu0 %v807
        %v809 = vand.u32 %v327, 4294901760
        %810 = vmatpush1.msra.mxu0 %v809
        %v811 = vand.u32 %v330, 4294901760
        %812 = vmatprep.subr.mxu0 %v811
        %v813 = vand.u32 %v329, 4294901760
        %814 = vmatpush1.msra.mxu0 %v813
        %v815 = vand.u32 %v332, 4294901760
        %816 = vmatprep.subr.mxu0 %v815
        %v817 = vand.u32 %v331, 4294901760
        %818 = vmatpush1.msra.mxu0 %v817
        %v819 = vand.u32 %v334, 4294901760
        %820 = vmatprep.subr.mxu0 %v819
        %v821 = vand.u32 %v333, 4294901760
        %822 = vmatpush1.msra.mxu0 %v821
        %823 = vmatprep.subr.mxu0 0.0
        %824 = vmatpush1.msra.mxu0 0.0
        %825 = vmatprep.subr.mxu0 0.0
        %826 = vmatpush1.msra.mxu0 0.0
        %827 = vmatprep.subr.mxu0 0.0
        %828 = vmatpush1.msra.mxu0 0.0
        %829 = vmatprep.subr.mxu0 0.0
        %830 = vmatpush1.msra.mxu0 0.0
        %831 = vmatprep.subr.mxu0 0.0
        %832 = vmatpush1.msra.mxu0 0.0
        %833 = vmatprep.subr.mxu0 0.0
        %834 = vmatpush1.msra.mxu0 0.0
        %835 = vmatprep.subr.mxu0 0.0
        %836 = vmatpush1.msra.mxu0 0.0
        %837 = vmatprep.subr.mxu0 0.0
        %838 = vmatpush1.msra.mxu0 0.0
        %839 = vmatprep.subr.mxu0 0.0
        %840 = vmatpush1.msra.mxu0 0.0
        %841 = vmatprep.subr.mxu0 0.0
        %842 = vmatpush1.msra.mxu0 0.0
        %843 = vmatprep.subr.mxu0 0.0
        %844 = vmatpush1.msra.mxu0 0.0
        %845 = vmatprep.subr.mxu0 0.0
        %846 = vmatpush1.msra.mxu0 0.0
        %847 = vmatprep.subr.mxu0 0.0
        %848 = vmatpush1.msra.mxu0 0.0
        %849 = vmatprep.subr.mxu0 0.0
        %850 = vmatpush1.msra.mxu0 0.0
        %851 = vmatprep.subr.mxu0 0.0
        %852 = vmatpush1.msra.mxu0 0.0
        %853 = vmatprep.subr.mxu0 0.0
        %854 = vmatpush1.msra.mxu0 0.0
        %855 = vmatprep.subr.mxu0 0.0
        %856 = vmatpush1.msra.mxu0 0.0
        %857 = vmatprep.subr.mxu0 0.0
        %858 = vmatpush1.msra.mxu0 0.0
        %859 = vmatprep.subr.mxu0 0.0
        %860 = vmatpush1.msra.mxu0 0.0
        %861 = vmatprep.subr.mxu0 0.0
        %862 = vmatpush1.msra.mxu0 0.0
        %863 = vmatprep.subr.mxu0 0.0
        %864 = vmatpush1.msra.mxu0 0.0
        %865 = vmatprep.subr.mxu0 0.0
        %866 = vmatpush1.msra.mxu0 0.0
        %867 = vmatprep.subr.mxu0 0.0
        %868 = vmatpush1.msra.mxu0 0.0
        %869 = vmatprep.subr.mxu0 0.0
        %870 = vmatpush1.msra.mxu0 0.0
        %871 = vmatprep.subr.mxu0 0.0
        %872 = vmatpush1.msra.mxu0 0.0
        %873 = vmatprep.subr.mxu0 0.0
        %874 = vmatpush1.msra.mxu0 0.0
        %875 = vmatprep.subr.mxu0 0.0
        %876 = vmatpush1.msra.mxu0 0.0
        %877 = vmatprep.subr.mxu0 0.0
        %878 = vmatpush1.msra.mxu0 0.0
        %879 = vmatprep.mubr.f32.mxu0 0.0
        %v880 = vand.u32 %v342, 4294901760
        %881 = vmatmul.mubr.f32.gmra.mrb[0].mxu0 %v880
        %v882 = vpop.f32.mrb[0].mxu0
        %v883 = vadd.f32 %v803, %v882
        %v884 = vpop.f32.mrb[0].mxu0
        %v885 = vadd.f32 %v805, %v884
        %886 = vdwg.mxu0
        %v887 = vmax.f32 %v883, 0.0
        %v888 = vmax.f32 %v885, 0.0
        %v889 = vld [vmem:[%s3] sm:$0xff]
        %890 = vset.pattern.permute.xlu0 3
        %891 = vperm.xlu0 %890, %v263
        %v892 = vpop.permute.xlu0 %891
        %vm894 = vcmask 64512
        %v896 = vsel %vm894, %v889, 0
        %v898 = vand.u32 %v888, 4294901760
        %899 = vmatprep.subr.mxu0 %v898
        %v900 = vand.u32 %v887, 4294901760
        %901 = vmatpush1.msra.mxu0 %v900
        %902 = vmatprep.subr.mxu0 0.0
        %903 = vmatpush1.msra.mxu0 0.0
        %904 = vmatprep.subr.mxu0 0.0
        %905 = vmatpush1.msra.mxu0 0.0
        %906 = vmatprep.subr.mxu0 0.0
        %907 = vmatpush1.msra.mxu0 0.0
        %908 = vmatprep.subr.mxu0 0.0
        %909 = vmatpush1.msra.mxu0 0.0
        %910 = vmatprep.subr.mxu0 0.0
        %911 = vmatpush1.msra.mxu0 0.0
        %912 = vmatprep.subr.mxu0 0.0
        %913 = vmatpush1.msra.mxu0 0.0
        %914 = vmatprep.subr.mxu0 0.0
        %915 = vmatpush1.msra.mxu0 0.0
        %916 = vmatprep.subr.mxu0 0.0
        %917 = vmatpush1.msra.mxu0 0.0
        %918 = vmatprep.subr.mxu0 0.0
        %919 = vmatpush1.msra.mxu0 0.0
        %920 = vmatprep.subr.mxu0 0.0
        %921 = vmatpush1.msra.mxu0 0.0
        %922 = vmatprep.subr.mxu0 0.0
        %923 = vmatpush1.msra.mxu0 0.0
        %924 = vmatprep.subr.mxu0 0.0
        %925 = vmatpush1.msra.mxu0 0.0
        %926 = vmatprep.subr.mxu0 0.0
        %927 = vmatpush1.msra.mxu0 0.0
        %928 = vmatprep.subr.mxu0 0.0
        %929 = vmatpush1.msra.mxu0 0.0
        %930 = vmatprep.subr.mxu0 0.0
        %931 = vmatpush1.msra.mxu0 0.0
        %932 = vmatprep.subr.mxu0 0.0
        %933 = vmatpush1.msra.mxu0 0.0
        %934 = vmatprep.subr.mxu0 0.0
        %935 = vmatpush1.msra.mxu0 0.0
        %936 = vmatprep.subr.mxu0 0.0
        %937 = vmatpush1.msra.mxu0 0.0
        %938 = vmatprep.subr.mxu0 0.0
        %939 = vmatpush1.msra.mxu0 0.0
        %940 = vmatprep.subr.mxu0 0.0
        %941 = vmatpush1.msra.mxu0 0.0
        %942 = vmatprep.subr.mxu0 0.0
        %943 = vmatpush1.msra.mxu0 0.0
        %944 = vmatprep.subr.mxu0 0.0
        %945 = vmatpush1.msra.mxu0 0.0
        %946 = vmatprep.subr.mxu0 0.0
        %947 = vmatpush1.msra.mxu0 0.0
        %948 = vmatprep.subr.mxu0 0.0
        %949 = vmatpush1.msra.mxu0 0.0
        %950 = vmatprep.subr.mxu0 0.0
        %951 = vmatpush1.msra.mxu0 0.0
        %952 = vmatprep.subr.mxu0 0.0
        %953 = vmatpush1.msra.mxu0 0.0
        %954 = vmatprep.subr.mxu0 0.0
        %955 = vmatpush1.msra.mxu0 0.0
        %956 = vmatprep.subr.mxu0 0.0
        %957 = vmatpush1.msra.mxu0 0.0
        %958 = vmatprep.subr.mxu0 0.0
        %959 = vmatpush1.msra.mxu0 0.0
        %960 = vmatprep.subr.mxu0 0.0
        %961 = vmatpush1.msra.mxu0 0.0
        %962 = vmatprep.subr.mxu0 0.0
        %963 = vmatpush1.msra.mxu0 0.0
        %964 = vmatprep.mubr.f32.mxu0 0.0
        %v965 = vand.u32 %v896, 4294901760
        %v966 = vsub.f32 %v896, %v965
        %v967 = vand.u32 %v966, 4294901760
        %v968 = vsub.f32 %v966, %v967
        %v969 = vand.u32 %v968, 4294901760
        %970 = vmatmul.mubr.f32.gmra.mrb[0].mxu0 %v969
        %v971 = vpop.f32.mrb[0].mxu0
        %v972 = vadd.f32 %v892, %v971
        %v973 = vpop.f32.mrb[0].mxu0
        %v974 = vadd.f32 %v892, %v973
        %975 = vdwg.mxu0
        %v976 = vand.u32 %v888, 4294901760
        %v977 = vsub.f32 %v888, %v976
        %v978 = vand.u32 %v977, 4294901760
        %v979 = vsub.f32 %v977, %v978
        %v980 = vand.u32 %v979, 4294901760
        %981 = vmatprep.subr.mxu0 %v980
        %v982 = vand.u32 %v887, 4294901760
        %v983 = vsub.f32 %v887, %v982
        %v984 = vand.u32 %v983, 4294901760
        %v985 = vsub.f32 %v983, %v984
        %v986 = vand.u32 %v985, 4294901760
        %987 = vmatpush1.msra.mxu0 %v986
        %988 = vmatprep.subr.mxu0 0.0
        %989 = vmatpush1.msra.mxu0 0.0
        %990 = vmatprep.subr.mxu0 0.0
        %991 = vmatpush1.msra.mxu0 0.0
        %992 = vmatprep.subr.mxu0 0.0
        %993 = vmatpush1.msra.mxu0 0.0
        %994 = vmatprep.subr.mxu0 0.0
        %995 = vmatpush1.msra.mxu0 0.0
        %996 = vmatprep.subr.mxu0 0.0
        %997 = vmatpush1.msra.mxu0 0.0
        %998 = vmatprep.subr.mxu0 0.0
        %999 = vmatpush1.msra.mxu0 0.0
        %1000 = vmatprep.subr.mxu0 0.0
        %1001 = vmatpush1.msra.mxu0 0.0
        %1002 = vmatprep.subr.mxu0 0.0
        %1003 = vmatpush1.msra.mxu0 0.0
        %1004 = vmatprep.subr.mxu0 0.0
        %1005 = vmatpush1.msra.mxu0 0.0
        %1006 = vmatprep.subr.mxu0 0.0
        %1007 = vmatpush1.msra.mxu0 0.0
        %1008 = vmatprep.subr.mxu0 0.0
        %1009 = vmatpush1.msra.mxu0 0.0
        %1010 = vmatprep.subr.mxu0 0.0
        %1011 = vmatpush1.msra.mxu0 0.0
        %1012 = vmatprep.subr.mxu0 0.0
        %1013 = vmatpush1.msra.mxu0 0.0
        %1014 = vmatprep.subr.mxu0 0.0
        %1015 = vmatpush1.msra.mxu0 0.0
        %1016 = vmatprep.subr.mxu0 0.0
        %1017 = vmatpush1.msra.mxu0 0.0
        %1018 = vmatprep.subr.mxu0 0.0
        %1019 = vmatpush1.msra.mxu0 0.0
        %1020 = vmatprep.subr.mxu0 0.0
        %1021 = vmatpush1.msra.mxu0 0.0
        %1022 = vmatprep.subr.mxu0 0.0
        %1023 = vmatpush1.msra.mxu0 0.0
        %1024 = vmatprep.subr.mxu0 0.0
        %1025 = vmatpush1.msra.mxu0 0.0
        %1026 = vmatprep.subr.mxu0 0.0
        %1027 = vmatpush1.msra.mxu0 0.0
        %1028 = vmatprep.subr.mxu0 0.0
        %1029 = vmatpush1.msra.mxu0 0.0
        %1030 = vmatprep.subr.mxu0 0.0
        %1031 = vmatpush1.msra.mxu0 0.0
        %1032 = vmatprep.subr.mxu0 0.0
        %1033 = vmatpush1.msra.mxu0 0.0
        %1034 = vmatprep.subr.mxu0 0.0
        %1035 = vmatpush1.msra.mxu0 0.0
        %1036 = vmatprep.subr.mxu0 0.0
        %1037 = vmatpush1.msra.mxu0 0.0
        %1038 = vmatprep.subr.mxu0 0.0
        %1039 = vmatpush1.msra.mxu0 0.0
        %1040 = vmatprep.subr.mxu0 0.0
        %1041 = vmatpush1.msra.mxu0 0.0
        %1042 = vmatprep.subr.mxu0 0.0
        %1043 = vmatpush1.msra.mxu0 0.0
        %1044 = vmatprep.subr.mxu0 0.0
        %1045 = vmatpush1.msra.mxu0 0.0
        %1046 = vmatprep.subr.mxu0 0.0
        %1047 = vmatpush1.msra.mxu0 0.0
        %1048 = vmatprep.subr.mxu0 0.0
        %1049 = vmatpush1.msra.mxu0 0.0
        %1050 = vmatprep.mubr.f32.mxu0 0.0
        %v1051 = vand.u32 %v896, 4294901760
        %1052 = vmatmul.mubr.f32.gmra.mrb[0].mxu0 %v1051
        %v1053 = vpop.f32.mrb[0].mxu0
        %v1054 = vadd.f32 %v972, %v1053
        %v1055 = vpop.f32.mrb[0].mxu0
        %v1056 = vadd.f32 %v974, %v1055
        %1057 = vdwg.mxu0
        %v1058 = vand.u32 %v888, 4294901760
        %v1059 = vsub.f32 %v888, %v1058
        %1060 = vmatprep.subr.mxu0 %v1059
        %v1061 = vand.u32 %v887, 4294901760
        %v1062 = vsub.f32 %v887, %v1061
        %1063 = vmatpush1.msra.mxu0 %v1062
        %1064 = vmatprep.subr.mxu0 0.0
        %1065 = vmatpush1.msra.mxu0 0.0
        %1066 = vmatprep.subr.mxu0 0.0
        %1067 = vmatpush1.msra.mxu0 0.0
        %1068 = vmatprep.subr.mxu0 0.0
        %1069 = vmatpush1.msra.mxu0 0.0
        %1070 = vmatprep.subr.mxu0 0.0
        %1071 = vmatpush1.msra.mxu0 0.0
        %1072 = vmatprep.subr.mxu0 0.0
        %1073 = vmatpush1.msra.mxu0 0.0
        %1074 = vmatprep.subr.mxu0 0.0
        %1075 = vmatpush1.msra.mxu0 0.0
        %1076 = vmatprep.subr.mxu0 0.0
        %1077 = vmatpush1.msra.mxu0 0.0
        %1078 = vmatprep.subr.mxu0 0.0
        %1079 = vmatpush1.msra.mxu0 0.0
        %1080 = vmatprep.subr.mxu0 0.0
        %1081 = vmatpush1.msra.mxu0 0.0
        %1082 = vmatprep.subr.mxu0 0.0
        %1083 = vmatpush1.msra.mxu0 0.0
        %1084 = vmatprep.subr.mxu0 0.0
        %1085 = vmatpush1.msra.mxu0 0.0
        %1086 = vmatprep.subr.mxu0 0.0
        %1087 = vmatpush1.msra.mxu0 0.0
        %1088 = vmatprep.subr.mxu0 0.0
        %1089 = vmatpush1.msra.mxu0 0.0
        %1090 = vmatprep.subr.mxu0 0.0
        %1091 = vmatpush1.msra.mxu0 0.0
        %1092 = vmatprep.subr.mxu0 0.0
        %1093 = vmatpush1.msra.mxu0 0.0
        %1094 = vmatprep.subr.mxu0 0.0
        %1095 = vmatpush1.msra.mxu0 0.0
        %1096 = vmatprep.subr.mxu0 0.0
        %1097 = vmatpush1.msra.mxu0 0.0
        %1098 = vmatprep.subr.mxu0 0.0
        %1099 = vmatpush1.msra.mxu0 0.0
        %1100 = vmatprep.subr.mxu0 0.0
        %1101 = vmatpush1.msra.mxu0 0.0
        %1102 = vmatprep.subr.mxu0 0.0
        %1103 = vmatpush1.msra.mxu0 0.0
        %1104 = vmatprep.subr.mxu0 0.0
        %1105 = vmatpush1.msra.mxu0 0.0
        %1106 = vmatprep.subr.mxu0 0.0
        %1107 = vmatpush1.msra.mxu0 0.0
        %1108 = vmatprep.subr.mxu0 0.0
        %1109 = vmatpush1.msra.mxu0 0.0
        %1110 = vmatprep.subr.mxu0 0.0
        %1111 = vmatpush1.msra.mxu0 0.0
        %1112 = vmatprep.subr.mxu0 0.0
        %1113 = vmatpush1.msra.mxu0 0.0
        %1114 = vmatprep.subr.mxu0 0.0
        %1115 = vmatpush1.msra.mxu0 0.0
        %1116 = vmatprep.subr.mxu0 0.0
        %1117 = vmatpush1.msra.mxu0 0.0
        %1118 = vmatprep.subr.mxu0 0.0
        %1119 = vmatpush1.msra.mxu0 0.0
        %1120 = vmatprep.subr.mxu0 0.0
        %1121 = vmatpush1.msra.mxu0 0.0
        %1122 = vmatprep.subr.mxu0 0.0
        %1123 = vmatpush1.msra.mxu0 0.0
        %1124 = vmatprep.subr.mxu0 0.0
        %1125 = vmatpush1.msra.mxu0 0.0
        %1126 = vmatprep.mubr.f32.mxu0 0.0
        %v1127 = vand.u32 %v896, 4294901760
        %v1128 = vsub.f32 %v896, %v1127
        %1129 = vmatmul.mubr.f32.gmra.mrb[0].mxu0 %v1128
        %v1130 = vpop.f32.mrb[0].mxu0
        %v1131 = vadd.f32 %v1054, %v1130
        %v1132 = vpop.f32.mrb[0].mxu0
        %v1133 = vadd.f32 %v1056, %v1132
        %1134 = vdwg.mxu0
        %v1135 = vand.u32 %v888, 4294901760
        %1136 = vmatprep.subr.mxu0 %v1135
        %v1137 = vand.u32 %v887, 4294901760
        %1138 = vmatpush1.msra.mxu0 %v1137
        %1139 = vmatprep.subr.mxu0 0.0
        %1140 = vmatpush1.msra.mxu0 0.0
        %1141 = vmatprep.subr.mxu0 0.0
        %1142 = vmatpush1.msra.mxu0 0.0
        %1143 = vmatprep.subr.mxu0 0.0
        %1144 = vmatpush1.msra.mxu0 0.0
        %1145 = vmatprep.subr.mxu0 0.0
        %1146 = vmatpush1.msra.mxu0 0.0
        %1147 = vmatprep.subr.mxu0 0.0
        %1148 = vmatpush1.msra.mxu0 0.0
        %1149 = vmatprep.subr.mxu0 0.0
        %1150 = vmatpush1.msra.mxu0 0.0
        %1151 = vmatprep.subr.mxu0 0.0
        %1152 = vmatpush1.msra.mxu0 0.0
        %1153 = vmatprep.subr.mxu0 0.0
        %1154 = vmatpush1.msra.mxu0 0.0
        %1155 = vmatprep.subr.mxu0 0.0
        %1156 = vmatpush1.msra.mxu0 0.0
        %1157 = vmatprep.subr.mxu0 0.0
        %1158 = vmatpush1.msra.mxu0 0.0
        %1159 = vmatprep.subr.mxu0 0.0
        %1160 = vmatpush1.msra.mxu0 0.0
        %1161 = vmatprep.subr.mxu0 0.0
        %1162 = vmatpush1.msra.mxu0 0.0
        %1163 = vmatprep.subr.mxu0 0.0
        %1164 = vmatpush1.msra.mxu0 0.0
        %1165 = vmatprep.subr.mxu0 0.0
        %1166 = vmatpush1.msra.mxu0 0.0
        %1167 = vmatprep.subr.mxu0 0.0
        %1168 = vmatpush1.msra.mxu0 0.0
        %1169 = vmatprep.subr.mxu0 0.0
        %1170 = vmatpush1.msra.mxu0 0.0
        %1171 = vmatprep.subr.mxu0 0.0
        %1172 = vmatpush1.msra.mxu0 0.0
        %1173 = vmatprep.subr.mxu0 0.0
        %1174 = vmatpush1.msra.mxu0 0.0
        %1175 = vmatprep.subr.mxu0 0.0
        %1176 = vmatpush1.msra.mxu0 0.0
        %1177 = vmatprep.subr.mxu0 0.0
        %1178 = vmatpush1.msra.mxu0 0.0
        %1179 = vmatprep.subr.mxu0 0.0
        %1180 = vmatpush1.msra.mxu0 0.0
        %1181 = vmatprep.subr.mxu0 0.0
        %1182 = vmatpush1.msra.mxu0 0.0
        %1183 = vmatprep.subr.mxu0 0.0
        %1184 = vmatpush1.msra.mxu0 0.0
        %1185 = vmatprep.subr.mxu0 0.0
        %1186 = vmatpush1.msra.mxu0 0.0
        %1187 = vmatprep.subr.mxu0 0.0
        %1188 = vmatpush1.msra.mxu0 0.0
        %1189 = vmatprep.subr.mxu0 0.0
        %1190 = vmatpush1.msra.mxu0 0.0
        %1191 = vmatprep.subr.mxu0 0.0
        %1192 = vmatpush1.msra.mxu0 0.0
        %1193 = vmatprep.subr.mxu0 0.0
        %1194 = vmatpush1.msra.mxu0 0.0
        %1195 = vmatprep.subr.mxu0 0.0
        %1196 = vmatpush1.msra.mxu0 0.0
        %1197 = vmatprep.subr.mxu0 0.0
        %1198 = vmatpush1.msra.mxu0 0.0
        %1199 = vmatprep.subr.mxu0 0.0
        %1200 = vmatpush1.msra.mxu0 0.0
        %1201 = vmatprep.mubr.f32.mxu0 0.0
        %v1202 = vand.u32 %v896, 4294901760
        %v1203 = vsub.f32 %v896, %v1202
        %v1204 = vand.u32 %v1203, 4294901760
        %1205 = vmatmul.mubr.f32.gmra.mrb[0].mxu0 %v1204
        %v1206 = vpop.f32.mrb[0].mxu0
        %v1207 = vadd.f32 %v1131, %v1206
        %v1208 = vpop.f32.mrb[0].mxu0
        %v1209 = vadd.f32 %v1133, %v1208
        %1210 = vdwg.mxu0
        %v1211 = vand.u32 %v888, 4294901760
        %v1212 = vsub.f32 %v888, %v1211
        %v1213 = vand.u32 %v1212, 4294901760
        %1214 = vmatprep.subr.mxu0 %v1213
        %v1215 = vand.u32 %v887, 4294901760
        %v1216 = vsub.f32 %v887, %v1215
        %v1217 = vand.u32 %v1216, 4294901760
        %1218 = vmatpush1.msra.mxu0 %v1217
        %1219 = vmatprep.subr.mxu0 0.0
        %1220 = vmatpush1.msra.mxu0 0.0
        %1221 = vmatprep.subr.mxu0 0.0
        %1222 = vmatpush1.msra.mxu0 0.0
        %1223 = vmatprep.subr.mxu0 0.0
        %1224 = vmatpush1.msra.mxu0 0.0
        %1225 = vmatprep.subr.mxu0 0.0
        %1226 = vmatpush1.msra.mxu0 0.0
        %1227 = vmatprep.subr.mxu0 0.0
        %1228 = vmatpush1.msra.mxu0 0.0
        %1229 = vmatprep.subr.mxu0 0.0
        %1230 = vmatpush1.msra.mxu0 0.0
        %1231 = vmatprep.subr.mxu0 0.0
        %1232 = vmatpush1.msra.mxu0 0.0
        %1233 = vmatprep.subr.mxu0 0.0
        %1234 = vmatpush1.msra.mxu0 0.0
        %1235 = vmatprep.subr.mxu0 0.0
        %1236 = vmatpush1.msra.mxu0 0.0
        %1237 = vmatprep.subr.mxu0 0.0
        %1238 = vmatpush1.msra.mxu0 0.0
        %1239 = vmatprep.subr.mxu0 0.0
        %1240 = vmatpush1.msra.mxu0 0.0
        %1241 = vmatprep.subr.mxu0 0.0
        %1242 = vmatpush1.msra.mxu0 0.0
        %1243 = vmatprep.subr.mxu0 0.0
        %1244 = vmatpush1.msra.mxu0 0.0
        %1245 = vmatprep.subr.mxu0 0.0
        %1246 = vmatpush1.msra.mxu0 0.0
        %1247 = vmatprep.subr.mxu0 0.0
        %1248 = vmatpush1.msra.mxu0 0.0
        %1249 = vmatprep.subr.mxu0 0.0
        %1250 = vmatpush1.msra.mxu0 0.0
        %1251 = vmatprep.subr.mxu0 0.0
        %1252 = vmatpush1.msra.mxu0 0.0
        %1253 = vmatprep.subr.mxu0 0.0
        %1254 = vmatpush1.msra.mxu0 0.0
        %1255 = vmatprep.subr.mxu0 0.0
        %1256 = vmatpush1.msra.mxu0 0.0
        %1257 = vmatprep.subr.mxu0 0.0
        %1258 = vmatpush1.msra.mxu0 0.0
        %1259 = vmatprep.subr.mxu0 0.0
        %1260 = vmatpush1.msra.mxu0 0.0
        %1261 = vmatprep.subr.mxu0 0.0
        %1262 = vmatpush1.msra.mxu0 0.0
        %1263 = vmatprep.subr.mxu0 0.0
        %1264 = vmatpush1.msra.mxu0 0.0
        %1265 = vmatprep.subr.mxu0 0.0
        %1266 = vmatpush1.msra.mxu0 0.0
        %1267 = vmatprep.subr.mxu0 0.0
        %1268 = vmatpush1.msra.mxu0 0.0
        %1269 = vmatprep.subr.mxu0 0.0
        %1270 = vmatpush1.msra.mxu0 0.0
        %1271 = vmatprep.subr.mxu0 0.0
        %1272 = vmatpush1.msra.mxu0 0.0
        %1273 = vmatprep.subr.mxu0 0.0
        %1274 = vmatpush1.msra.mxu0 0.0
        %1275 = vmatprep.subr.mxu0 0.0
        %1276 = vmatpush1.msra.mxu0 0.0
        %1277 = vmatprep.subr.mxu0 0.0
        %1278 = vmatpush1.msra.mxu0 0.0
        %1279 = vmatprep.subr.mxu0 0.0
        %1280 = vmatpush1.msra.mxu0 0.0
        %1281 = vmatprep.mubr.f32.mxu0 0.0
        %v1282 = vand.u32 %v896, 4294901760
        %1283 = vmatmul.mubr.f32.gmra.mrb[0].mxu0 %v1282
        %v1284 = vpop.f32.mrb[0].mxu0
        %v1285 = vadd.f32 %v1207, %v1284
        %v1286 = vpop.f32.mrb[0].mxu0
        %v1287 = vadd.f32 %v1209, %v1286
        %1288 = vdwg.mxu0
        %v1289 = vand.u32 %v888, 4294901760
        %1290 = vmatprep.subr.mxu0 %v1289
        %v1291 = vand.u32 %v887, 4294901760
        %1292 = vmatpush1.msra.mxu0 %v1291
        %1293 = vmatprep.subr.mxu0 0.0
        %1294 = vmatpush1.msra.mxu0 0.0
        %1295 = vmatprep.subr.mxu0 0.0
        %1296 = vmatpush1.msra.mxu0 0.0
        %1297 = vmatprep.subr.mxu0 0.0
        %1298 = vmatpush1.msra.mxu0 0.0
        %1299 = vmatprep.subr.mxu0 0.0
        %1300 = vmatpush1.msra.mxu0 0.0
        %1301 = vmatprep.subr.mxu0 0.0
        %1302 = vmatpush1.msra.mxu0 0.0
        %1303 = vmatprep.subr.mxu0 0.0
        %1304 = vmatpush1.msra.mxu0 0.0
        %1305 = vmatprep.subr.mxu0 0.0
        %1306 = vmatpush1.msra.mxu0 0.0
        %1307 = vmatprep.subr.mxu0 0.0
        %1308 = vmatpush1.msra.mxu0 0.0
        %1309 = vmatprep.subr.mxu0 0.0
        %1310 = vmatpush1.msra.mxu0 0.0
        %1311 = vmatprep.subr.mxu0 0.0
        %1312 = vmatpush1.msra.mxu0 0.0
        %1313 = vmatprep.subr.mxu0 0.0
        %1314 = vmatpush1.msra.mxu0 0.0
        %1315 = vmatprep.subr.mxu0 0.0
        %1316 = vmatpush1.msra.mxu0 0.0
        %1317 = vmatprep.subr.mxu0 0.0
        %1318 = vmatpush1.msra.mxu0 0.0
        %1319 = vmatprep.subr.mxu0 0.0
        %1320 = vmatpush1.msra.mxu0 0.0
        %1321 = vmatprep.subr.mxu0 0.0
        %1322 = vmatpush1.msra.mxu0 0.0
        %1323 = vmatprep.subr.mxu0 0.0
        %1324 = vmatpush1.msra.mxu0 0.0
        %1325 = vmatprep.subr.mxu0 0.0
        %1326 = vmatpush1.msra.mxu0 0.0
        %1327 = vmatprep.subr.mxu0 0.0
        %1328 = vmatpush1.msra.mxu0 0.0
        %1329 = vmatprep.subr.mxu0 0.0
        %1330 = vmatpush1.msra.mxu0 0.0
        %1331 = vmatprep.subr.mxu0 0.0
        %1332 = vmatpush1.msra.mxu0 0.0
        %1333 = vmatprep.subr.mxu0 0.0
        %1334 = vmatpush1.msra.mxu0 0.0
        %1335 = vmatprep.subr.mxu0 0.0
        %1336 = vmatpush1.msra.mxu0 0.0
        %1337 = vmatprep.subr.mxu0 0.0
        %1338 = vmatpush1.msra.mxu0 0.0
        %1339 = vmatprep.subr.mxu0 0.0
        %1340 = vmatpush1.msra.mxu0 0.0
        %1341 = vmatprep.subr.mxu0 0.0
        %1342 = vmatpush1.msra.mxu0 0.0
        %1343 = vmatprep.subr.mxu0 0.0
        %1344 = vmatpush1.msra.mxu0 0.0
        %1345 = vmatprep.subr.mxu0 0.0
        %1346 = vmatpush1.msra.mxu0 0.0
        %1347 = vmatprep.subr.mxu0 0.0
        %1348 = vmatpush1.msra.mxu0 0.0
        %1349 = vmatprep.subr.mxu0 0.0
        %1350 = vmatpush1.msra.mxu0 0.0
        %1351 = vmatprep.subr.mxu0 0.0
        %1352 = vmatpush1.msra.mxu0 0.0
        %1353 = vmatprep.subr.mxu0 0.0
        %1354 = vmatpush1.msra.mxu0 0.0
        %1355 = vmatprep.mubr.f32.mxu0 0.0
        %v1356 = vand.u32 %v896, 4294901760
        %1357 = vmatmul.mubr.f32.gmra.mrb[0].mxu0 %v1356
        %v1358 = vpop.f32.mrb[0].mxu0
        %v1359 = vadd.f32 %v1285, %v1358
        %v1360 = vpop.f32.mrb[0].mxu0
        %v1361 = vadd.f32 %v1287, %v1360
        %1362 = vdwg.mxu0
        %v1363 = vmax.f32 %v1359, 0.0
        %v1364 = vmax.f32 %v1361, 0.0
        %v1365 = vld [vmem:[%s4] sm:$0xff]
        %v1366 = vld [vmem:[%s4 + $0x8] sm:$0xff]
        %v1367 = vld [vmem:[%s4 + $0x10] sm:$0xff]
        %v1368 = vld [vmem:[%s4 + $0x18] sm:$0xff]
        %1369 = vset.pattern.permute.xlu0 4
        %1370 = vperm.xlu0 %1369, %v263
        %v1371 = vpop.permute.xlu0 %1370
        %1373 = vset.pattern.permute.xlu0 4
        %1374 = vperm.xlu0 %1373, %v264
        %v1375 = vpop.permute.xlu0 %1374
        %1377 = vset.pattern.permute.xlu0 4
        %1378 = vperm.xlu0 %1377, %v265
        %v1379 = vpop.permute.xlu0 %1378
        %1381 = vset.pattern.permute.xlu0 4
        %1382 = vperm.xlu0 %1381, %v266
        %v1383 = vpop.permute.xlu0 %1382
        %v1386 = vsel %vm894, %v1365, 0
        %v1389 = vsel %vm894, %v1366, 0
        %v1392 = vsel %vm894, %v1367, 0
        %v1395 = vsel %vm894, %v1368, 0
        %v1397 = vand.u32 %v1364, 4294901760
        %1398 = vmatprep.subr.mxu0 %v1397
        %v1399 = vand.u32 %v1363, 4294901760
        %1400 = vmatpush1.msra.mxu0 %v1399
        %1401 = vmatprep.subr.mxu0 0.0
        %1402 = vmatpush1.msra.mxu0 0.0
        %1403 = vmatprep.subr.mxu0 0.0
        %1404 = vmatpush1.msra.mxu0 0.0
        %1405 = vmatprep.subr.mxu0 0.0
        %1406 = vmatpush1.msra.mxu0 0.0
        %1407 = vmatprep.subr.mxu0 0.0
        %1408 = vmatpush1.msra.mxu0 0.0
        %1409 = vmatprep.subr.mxu0 0.0
        %1410 = vmatpush1.msra.mxu0 0.0
        %1411 = vmatprep.subr.mxu0 0.0
        %1412 = vmatpush1.msra.mxu0 0.0
        %1413 = vmatprep.subr.mxu0 0.0
        %1414 = vmatpush1.msra.mxu0 0.0
        %1415 = vmatprep.subr.mxu0 0.0
        %1416 = vmatpush1.msra.mxu0 0.0
        %1417 = vmatprep.subr.mxu0 0.0
        %1418 = vmatpush1.msra.mxu0 0.0
        %1419 = vmatprep.subr.mxu0 0.0
        %1420 = vmatpush1.msra.mxu0 0.0
        %1421 = vmatprep.subr.mxu0 0.0
        %1422 = vmatpush1.msra.mxu0 0.0
        %1423 = vmatprep.subr.mxu0 0.0
        %1424 = vmatpush1.msra.mxu0 0.0
        %1425 = vmatprep.subr.mxu0 0.0
        %1426 = vmatpush1.msra.mxu0 0.0
        %1427 = vmatprep.subr.mxu0 0.0
        %1428 = vmatpush1.msra.mxu0 0.0
        %1429 = vmatprep.subr.mxu0 0.0
        %1430 = vmatpush1.msra.mxu0 0.0
        %1431 = vmatprep.subr.mxu0 0.0
        %1432 = vmatpush1.msra.mxu0 0.0
        %1433 = vmatprep.subr.mxu0 0.0
        %1434 = vmatpush1.msra.mxu0 0.0
        %1435 = vmatprep.subr.mxu0 0.0
        %1436 = vmatpush1.msra.mxu0 0.0
        %1437 = vmatprep.subr.mxu0 0.0
        %1438 = vmatpush1.msra.mxu0 0.0
        %1439 = vmatprep.subr.mxu0 0.0
        %1440 = vmatpush1.msra.mxu0 0.0
        %1441 = vmatprep.subr.mxu0 0.0
        %1442 = vmatpush1.msra.mxu0 0.0
        %1443 = vmatprep.subr.mxu0 0.0
        %1444 = vmatpush1.msra.mxu0 0.0
        %1445 = vmatprep.subr.mxu0 0.0
        %1446 = vmatpush1.msra.mxu0 0.0
        %1447 = vmatprep.subr.mxu0 0.0
        %1448 = vmatpush1.msra.mxu0 0.0
        %1449 = vmatprep.subr.mxu0 0.0
        %1450 = vmatpush1.msra.mxu0 0.0
        %1451 = vmatprep.subr.mxu0 0.0
        %1452 = vmatpush1.msra.mxu0 0.0
        %1453 = vmatprep.subr.mxu0 0.0
        %1454 = vmatpush1.msra.mxu0 0.0
        %1455 = vmatprep.subr.mxu0 0.0
        %1456 = vmatpush1.msra.mxu0 0.0
        %1457 = vmatprep.subr.mxu0 0.0
        %1458 = vmatpush1.msra.mxu0 0.0
        %1459 = vmatprep.subr.mxu0 0.0
        %1460 = vmatpush1.msra.mxu0 0.0
        %1461 = vmatprep.subr.mxu0 0.0
        %1462 = vmatpush1.msra.mxu0 0.0
        %1463 = vmatprep.mubr.f32.mxu0 0.0
        %v1464 = vand.u32 %v1386, 4294901760
        %v1465 = vsub.f32 %v1386, %v1464
        %v1466 = vand.u32 %v1465, 4294901760
        %v1467 = vsub.f32 %v1465, %v1466
        %v1468 = vand.u32 %v1467, 4294901760
        %1469 = vmatmul.mubr.f32.gmra.mrb[0].mxu0 %v1468
        %v1470 = vpop.f32.mrb[0].mxu0
        %v1471 = vadd.f32 %v1371, %v1470
        %v1472 = vpop.f32.mrb[0].mxu0
        %v1473 = vadd.f32 %v1371, %v1472
        %1474 = vmatprep.mubr.f32.mxu0 0.0
        %v1475 = vand.u32 %v1389, 4294901760
        %v1476 = vsub.f32 %v1389, %v1475
        %v1477 = vand.u32 %v1476, 4294901760
        %v1478 = vsub.f32 %v1476, %v1477
        %v1479 = vand.u32 %v1478, 4294901760
        %1480 = vmatmul.mubr.f32.gmra.mrb[0].mxu0 %v1479
        %v1481 = vpop.f32.mrb[0].mxu0
        %v1482 = vadd.f32 %v1375, %v1481
        %v1483 = vpop.f32.mrb[0].mxu0
        %v1484 = vadd.f32 %v1375, %v1483
        %1485 = vmatprep.mubr.f32.mxu0 0.0
        %v1486 = vand.u32 %v1392, 4294901760
        %v1487 = vsub.f32 %v1392, %v1486
        %v1488 = vand.u32 %v1487, 4294901760
        %v1489 = vsub.f32 %v1487, %v1488
        %v1490 = vand.u32 %v1489, 4294901760
        %1491 = vmatmul.mubr.f32.gmra.mrb[0].mxu0 %v1490
        %v1492 = vpop.f32.mrb[0].mxu0
        %v1493 = vadd.f32 %v1379, %v1492
        %v1494 = vpop.f32.mrb[0].mxu0
        %v1495 = vadd.f32 %v1379, %v1494
        %1496 = vmatprep.mubr.f32.mxu0 0.0
        %v1497 = vand.u32 %v1395, 4294901760
        %v1498 = vsub.f32 %v1395, %v1497
        %v1499 = vand.u32 %v1498, 4294901760
        %v1500 = vsub.f32 %v1498, %v1499
        %v1501 = vand.u32 %v1500, 4294901760
        %1502 = vmatmul.mubr.f32.gmra.mrb[0].mxu0 %v1501
        %v1503 = vpop.f32.mrb[0].mxu0
        %v1504 = vadd.f32 %v1383, %v1503
        %v1505 = vpop.f32.mrb[0].mxu0
        %v1506 = vadd.f32 %v1383, %v1505
        %1507 = vdwg.mxu0
        %v1508 = vand.u32 %v1364, 4294901760
        %v1509 = vsub.f32 %v1364, %v1508
        %v1510 = vand.u32 %v1509, 4294901760
        %v1511 = vsub.f32 %v1509, %v1510
        %v1512 = vand.u32 %v1511, 4294901760
        %1513 = vmatprep.subr.mxu0 %v1512
        %v1514 = vand.u32 %v1363, 4294901760
        %v1515 = vsub.f32 %v1363, %v1514
        %v1516 = vand.u32 %v1515, 4294901760
        %v1517 = vsub.f32 %v1515, %v1516
        %v1518 = vand.u32 %v1517, 4294901760
        %1519 = vmatpush1.msra.mxu0 %v1518
        %1520 = vmatprep.subr.mxu0 0.0
        %1521 = vmatpush1.msra.mxu0 0.0
        %1522 = vmatprep.subr.mxu0 0.0
        %1523 = vmatpush1.msra.mxu0 0.0
        %1524 = vmatprep.subr.mxu0 0.0
        %1525 = vmatpush1.msra.mxu0 0.0
        %1526 = vmatprep.subr.mxu0 0.0
        %1527 = vmatpush1.msra.mxu0 0.0
        %1528 = vmatprep.subr.mxu0 0.0
        %1529 = vmatpush1.msra.mxu0 0.0
        %1530 = vmatprep.subr.mxu0 0.0
        %1531 = vmatpush1.msra.mxu0 0.0
        %1532 = vmatprep.subr.mxu0 0.0
        %1533 = vmatpush1.msra.mxu0 0.0
        %1534 = vmatprep.subr.mxu0 0.0
        %1535 = vmatpush1.msra.mxu0 0.0
        %1536 = vmatprep.subr.mxu0 0.0
        %1537 = vmatpush1.msra.mxu0 0.0
        %1538 = vmatprep.subr.mxu0 0.0
        %1539 = vmatpush1.msra.mxu0 0.0
        %1540 = vmatprep.subr.mxu0 0.0
        %1541 = vmatpush1.msra.mxu0 0.0
        %1542 = vmatprep.subr.mxu0 0.0
        %1543 = vmatpush1.msra.mxu0 0.0
        %1544 = vmatprep.subr.mxu0 0.0
        %1545 = vmatpush1.msra.mxu0 0.0
        %1546 = vmatprep.subr.mxu0 0.0
        %1547 = vmatpush1.msra.mxu0 0.0
        %1548 = vmatprep.subr.mxu0 0.0
        %1549 = vmatpush1.msra.mxu0 0.0
        %1550 = vmatprep.subr.mxu0 0.0
        %1551 = vmatpush1.msra.mxu0 0.0
        %1552 = vmatprep.subr.mxu0 0.0
        %1553 = vmatpush1.msra.mxu0 0.0
        %1554 = vmatprep.subr.mxu0 0.0
        %1555 = vmatpush1.msra.mxu0 0.0
        %1556 = vmatprep.subr.mxu0 0.0
        %1557 = vmatpush1.msra.mxu0 0.0
        %1558 = vmatprep.subr.mxu0 0.0
        %1559 = vmatpush1.msra.mxu0 0.0
        %1560 = vmatprep.subr.mxu0 0.0
        %1561 = vmatpush1.msra.mxu0 0.0
        %1562 = vmatprep.subr.mxu0 0.0
        %1563 = vmatpush1.msra.mxu0 0.0
        %1564 = vmatprep.subr.mxu0 0.0
        %1565 = vmatpush1.msra.mxu0 0.0
        %1566 = vmatprep.subr.mxu0 0.0
        %1567 = vmatpush1.msra.mxu0 0.0
        %1568 = vmatprep.subr.mxu0 0.0
        %1569 = vmatpush1.msra.mxu0 0.0
        %1570 = vmatprep.subr.mxu0 0.0
        %1571 = vmatpush1.msra.mxu0 0.0
        %1572 = vmatprep.subr.mxu0 0.0
        %1573 = vmatpush1.msra.mxu0 0.0
        %1574 = vmatprep.subr.mxu0 0.0
        %1575 = vmatpush1.msra.mxu0 0.0
        %1576 = vmatprep.subr.mxu0 0.0
        %1577 = vmatpush1.msra.mxu0 0.0
        %1578 = vmatprep.subr.mxu0 0.0
        %1579 = vmatpush1.msra.mxu0 0.0
        %1580 = vmatprep.subr.mxu0 0.0
        %1581 = vmatpush1.msra.mxu0 0.0
        %1582 = vmatprep.mubr.f32.mxu0 0.0
        %v1583 = vand.u32 %v1386, 4294901760
        %1584 = vmatmul.mubr.f32.gmra.mrb[0].mxu0 %v1583
        %v1585 = vpop.f32.mrb[0].mxu0
        %v1586 = vadd.f32 %v1471, %v1585
        %v1587 = vpop.f32.mrb[0].mxu0
        %v1588 = vadd.f32 %v1473, %v1587
        %1589 = vmatprep.mubr.f32.mxu0 0.0
        %v1590 = vand.u32 %v1389, 4294901760
        %1591 = vmatmul.mubr.f32.gmra.mrb[0].mxu0 %v1590
        %v1592 = vpop.f32.mrb[0].mxu0
        %v1593 = vadd.f32 %v1482, %v1592
        %v1594 = vpop.f32.mrb[0].mxu0
        %v1595 = vadd.f32 %v1484, %v1594
        %1596 = vmatprep.mubr.f32.mxu0 0.0
        %v1597 = vand.u32 %v1392, 4294901760
        %1598 = vmatmul.mubr.f32.gmra.mrb[0].mxu0 %v1597
        %v1599 = vpop.f32.mrb[0].mxu0
        %v1600 = vadd.f32 %v1493, %v1599
        %v1601 = vpop.f32.mrb[0].mxu0
        %v1602 = vadd.f32 %v1495, %v1601
        %1603 = vmatprep.mubr.f32.mxu0 0.0
        %v1604 = vand.u32 %v1395, 4294901760
        %1605 = vmatmul.mubr.f32.gmra.mrb[0].mxu0 %v1604
        %v1606 = vpop.f32.mrb[0].mxu0
        %v1607 = vadd.f32 %v1504, %v1606
        %v1608 = vpop.f32.mrb[0].mxu0
        %v1609 = vadd.f32 %v1506, %v1608
        %1610 = vdwg.mxu0
        %v1611 = vand.u32 %v1364, 4294901760
        %v1612 = vsub.f32 %v1364, %v1611
        %1613 = vmatprep.subr.mxu0 %v1612
        %v1614 = vand.u32 %v1363, 4294901760
        %v1615 = vsub.f32 %v1363, %v1614
        %1616 = vmatpush1.msra.mxu0 %v1615
        %1617 = vmatprep.subr.mxu0 0.0
        %1618 = vmatpush1.msra.mxu0 0.0
        %1619 = vmatprep.subr.mxu0 0.0
        %1620 = vmatpush1.msra.mxu0 0.0
        %1621 = vmatprep.subr.mxu0 0.0
        %1622 = vmatpush1.msra.mxu0 0.0
        %1623 = vmatprep.subr.mxu0 0.0
        %1624 = vmatpush1.msra.mxu0 0.0
        %1625 = vmatprep.subr.mxu0 0.0
        %1626 = vmatpush1.msra.mxu0 0.0
        %1627 = vmatprep.subr.mxu0 0.0
        %1628 = vmatpush1.msra.mxu0 0.0
        %1629 = vmatprep.subr.mxu0 0.0
        %1630 = vmatpush1.msra.mxu0 0.0
        %1631 = vmatprep.subr.mxu0 0.0
        %1632 = vmatpush1.msra.mxu0 0.0
        %1633 = vmatprep.subr.mxu0 0.0
        %1634 = vmatpush1.msra.mxu0 0.0
        %1635 = vmatprep.subr.mxu0 0.0
        %1636 = vmatpush1.msra.mxu0 0.0
        %1637 = vmatprep.subr.mxu0 0.0
        %1638 = vmatpush1.msra.mxu0 0.0
        %1639 = vmatprep.subr.mxu0 0.0
        %1640 = vmatpush1.msra.mxu0 0.0
        %1641 = vmatprep.subr.mxu0 0.0
        %1642 = vmatpush1.msra.mxu0 0.0
        %1643 = vmatprep.subr.mxu0 0.0
        %1644 = vmatpush1.msra.mxu0 0.0
        %1645 = vmatprep.subr.mxu0 0.0
        %1646 = vmatpush1.msra.mxu0 0.0
        %1647 = vmatprep.subr.mxu0 0.0
        %1648 = vmatpush1.msra.mxu0 0.0
        %1649 = vmatprep.subr.mxu0 0.0
        %1650 = vmatpush1.msra.mxu0 0.0
        %1651 = vmatprep.subr.mxu0 0.0
        %1652 = vmatpush1.msra.mxu0 0.0
        %1653 = vmatprep.subr.mxu0 0.0
        %1654 = vmatpush1.msra.mxu0 0.0
        %1655 = vmatprep.subr.mxu0 0.0
        %1656 = vmatpush1.msra.mxu0 0.0
        %1657 = vmatprep.subr.mxu0 0.0
        %1658 = vmatpush1.msra.mxu0 0.0
        %1659 = vmatprep.subr.mxu0 0.0
        %1660 = vmatpush1.msra.mxu0 0.0
        %1661 = vmatprep.subr.mxu0 0.0
        %1662 = vmatpush1.msra.mxu0 0.0
        %1663 = vmatprep.subr.mxu0 0.0
        %1664 = vmatpush1.msra.mxu0 0.0
        %1665 = vmatprep.subr.mxu0 0.0
        %1666 = vmatpush1.msra.mxu0 0.0
        %1667 = vmatprep.subr.mxu0 0.0
        %1668 = vmatpush1.msra.mxu0 0.0
        %1669 = vmatprep.subr.mxu0 0.0
        %1670 = vmatpush1.msra.mxu0 0.0
        %1671 = vmatprep.subr.mxu0 0.0
        %1672 = vmatpush1.msra.mxu0 0.0
        %1673 = vmatprep.subr.mxu0 0.0
        %1674 = vmatpush1.msra.mxu0 0.0
        %1675 = vmatprep.subr.mxu0 0.0
        %1676 = vmatpush1.msra.mxu0 0.0
        %1677 = vmatprep.subr.mxu0 0.0
        %1678 = vmatpush1.msra.mxu0 0.0
        %1679 = vmatprep.mubr.f32.mxu0 0.0
        %v1680 = vand.u32 %v1386, 4294901760
        %v1681 = vsub.f32 %v1386, %v1680
        %1682 = vmatmul.mubr.f32.gmra.mrb[0].mxu0 %v1681
        %v1683 = vpop.f32.mrb[0].mxu0
        %v1684 = vadd.f32 %v1586, %v1683
        %v1685 = vpop.f32.mrb[0].mxu0
        %v1686 = vadd.f32 %v1588, %v1685
        %1687 = vmatprep.mubr.f32.mxu0 0.0
        %v1688 = vand.u32 %v1389, 4294901760
        %v1689 = vsub.f32 %v1389, %v1688
        %1690 = vmatmul.mubr.f32.gmra.mrb[0].mxu0 %v1689
        %v1691 = vpop.f32.mrb[0].mxu0
        %v1692 = vadd.f32 %v1593, %v1691
        %v1693 = vpop.f32.mrb[0].mxu0
        %v1694 = vadd.f32 %v1595, %v1693
        %1695 = vmatprep.mubr.f32.mxu0 0.0
        %v1696 = vand.u32 %v1392, 4294901760
        %v1697 = vsub.f32 %v1392, %v1696
        %1698 = vmatmul.mubr.f32.gmra.mrb[0].mxu0 %v1697
        %v1699 = vpop.f32.mrb[0].mxu0
        %v1700 = vadd.f32 %v1600, %v1699
        %v1701 = vpop.f32.mrb[0].mxu0
        %v1702 = vadd.f32 %v1602, %v1701
        %1703 = vmatprep.mubr.f32.mxu0 0.0
        %v1704 = vand.u32 %v1395, 4294901760
        %v1705 = vsub.f32 %v1395, %v1704
        %1706 = vmatmul.mubr.f32.gmra.mrb[0].mxu0 %v1705
        %v1707 = vpop.f32.mrb[0].mxu0
        %v1708 = vadd.f32 %v1607, %v1707
        %v1709 = vpop.f32.mrb[0].mxu0
        %v1710 = vadd.f32 %v1609, %v1709
        %1711 = vdwg.mxu0
        %v1712 = vand.u32 %v1364, 4294901760
        %1713 = vmatprep.subr.mxu0 %v1712
        %v1714 = vand.u32 %v1363, 4294901760
        %1715 = vmatpush1.msra.mxu0 %v1714
        %1716 = vmatprep.subr.mxu0 0.0
        %1717 = vmatpush1.msra.mxu0 0.0
        %1718 = vmatprep.subr.mxu0 0.0
        %1719 = vmatpush1.msra.mxu0 0.0
        %1720 = vmatprep.subr.mxu0 0.0
        %1721 = vmatpush1.msra.mxu0 0.0
        %1722 = vmatprep.subr.mxu0 0.0
        %1723 = vmatpush1.msra.mxu0 0.0
        %1724 = vmatprep.subr.mxu0 0.0
        %1725 = vmatpush1.msra.mxu0 0.0
        %1726 = vmatprep.subr.mxu0 0.0
        %1727 = vmatpush1.msra.mxu0 0.0
        %1728 = vmatprep.subr.mxu0 0.0
        %1729 = vmatpush1.msra.mxu0 0.0
        %1730 = vmatprep.subr.mxu0 0.0
        %1731 = vmatpush1.msra.mxu0 0.0
        %1732 = vmatprep.subr.mxu0 0.0
        %1733 = vmatpush1.msra.mxu0 0.0
        %1734 = vmatprep.subr.mxu0 0.0
        %1735 = vmatpush1.msra.mxu0 0.0
        %1736 = vmatprep.subr.mxu0 0.0
        %1737 = vmatpush1.msra.mxu0 0.0
        %1738 = vmatprep.subr.mxu0 0.0
        %1739 = vmatpush1.msra.mxu0 0.0
        %1740 = vmatprep.subr.mxu0 0.0
        %1741 = vmatpush1.msra.mxu0 0.0
        %1742 = vmatprep.subr.mxu0 0.0
        %1743 = vmatpush1.msra.mxu0 0.0
        %1744 = vmatprep.subr.mxu0 0.0
        %1745 = vmatpush1.msra.mxu0 0.0
        %1746 = vmatprep.subr.mxu0 0.0
        %1747 = vmatpush1.msra.mxu0 0.0
        %1748 = vmatprep.subr.mxu0 0.0
        %1749 = vmatpush1.msra.mxu0 0.0
        %1750 = vmatprep.subr.mxu0 0.0
        %1751 = vmatpush1.msra.mxu0 0.0
        %1752 = vmatprep.subr.mxu0 0.0
        %1753 = vmatpush1.msra.mxu0 0.0
        %1754 = vmatprep.subr.mxu0 0.0
        %1755 = vmatpush1.msra.mxu0 0.0
        %1756 = vmatprep.subr.mxu0 0.0
        %1757 = vmatpush1.msra.mxu0 0.0
        %1758 = vmatprep.subr.mxu0 0.0
        %1759 = vmatpush1.msra.mxu0 0.0
        %1760 = vmatprep.subr.mxu0 0.0
        %1761 = vmatpush1.msra.mxu0 0.0
        %1762 = vmatprep.subr.mxu0 0.0
        %1763 = vmatpush1.msra.mxu0 0.0
        %1764 = vmatprep.subr.mxu0 0.0
        %1765 = vmatpush1.msra.mxu0 0.0
        %1766 = vmatprep.subr.mxu0 0.0
        %1767 = vmatpush1.msra.mxu0 0.0
        %1768 = vmatprep.subr.mxu0 0.0
        %1769 = vmatpush1.msra.mxu0 0.0
        %1770 = vmatprep.subr.mxu0 0.0
        %1771 = vmatpush1.msra.mxu0 0.0
        %1772 = vmatprep.subr.mxu0 0.0
        %1773 = vmatpush1.msra.mxu0 0.0
        %1774 = vmatprep.subr.mxu0 0.0
        %1775 = vmatpush1.msra.mxu0 0.0
        %1776 = vmatprep.subr.mxu0 0.0
        %1777 = vmatpush1.msra.mxu0 0.0
        %1778 = vmatprep.mubr.f32.mxu0 0.0
        %v1779 = vand.u32 %v1386, 4294901760
        %v1780 = vsub.f32 %v1386, %v1779
        %v1781 = vand.u32 %v1780, 4294901760
        %1782 = vmatmul.mubr.f32.gmra.mrb[0].mxu0 %v1781
        %v1783 = vpop.f32.mrb[0].mxu0
        %v1784 = vadd.f32 %v1684, %v1783
        %v1785 = vpop.f32.mrb[0].mxu0
        %v1786 = vadd.f32 %v1686, %v1785
        %1787 = vmatprep.mubr.f32.mxu0 0.0
        %v1788 = vand.u32 %v1389, 4294901760
        %v1789 = vsub.f32 %v1389, %v1788
        %v1790 = vand.u32 %v1789, 4294901760
        %1791 = vmatmul.mubr.f32.gmra.mrb[0].mxu0 %v1790
        %v1792 = vpop.f32.mrb[0].mxu0
        %v1793 = vadd.f32 %v1692, %v1792
        %v1794 = vpop.f32.mrb[0].mxu0
        %v1795 = vadd.f32 %v1694, %v1794
        %1796 = vmatprep.mubr.f32.mxu0 0.0
        %v1797 = vand.u32 %v1392, 4294901760
        %v1798 = vsub.f32 %v1392, %v1797
        %v1799 = vand.u32 %v1798, 4294901760
        %1800 = vmatmul.mubr.f32.gmra.mrb[0].mxu0 %v1799
        %v1801 = vpop.f32.mrb[0].mxu0
        %v1802 = vadd.f32 %v1700, %v1801
        %v1803 = vpop.f32.mrb[0].mxu0
        %v1804 = vadd.f32 %v1702, %v1803
        %1805 = vmatprep.mubr.f32.mxu0 0.0
        %v1806 = vand.u32 %v1395, 4294901760
        %v1807 = vsub.f32 %v1395, %v1806
        %v1808 = vand.u32 %v1807, 4294901760
        %1809 = vmatmul.mubr.f32.gmra.mrb[0].mxu0 %v1808
        %v1810 = vpop.f32.mrb[0].mxu0
        %v1811 = vadd.f32 %v1708, %v1810
        %v1812 = vpop.f32.mrb[0].mxu0
        %v1813 = vadd.f32 %v1710, %v1812
        %1814 = vdwg.mxu0
        %v1815 = vand.u32 %v1364, 4294901760
        %v1816 = vsub.f32 %v1364, %v1815
        %v1817 = vand.u32 %v1816, 4294901760
        %1818 = vmatprep.subr.mxu0 %v1817
        %v1819 = vand.u32 %v1363, 4294901760
        %v1820 = vsub.f32 %v1363, %v1819
        %v1821 = vand.u32 %v1820, 4294901760
        %1822 = vmatpush1.msra.mxu0 %v1821
        %1823 = vmatprep.subr.mxu0 0.0
        %1824 = vmatpush1.msra.mxu0 0.0
        %1825 = vmatprep.subr.mxu0 0.0
        %1826 = vmatpush1.msra.mxu0 0.0
        %1827 = vmatprep.subr.mxu0 0.0
        %1828 = vmatpush1.msra.mxu0 0.0
        %1829 = vmatprep.subr.mxu0 0.0
        %1830 = vmatpush1.msra.mxu0 0.0
        %1831 = vmatprep.subr.mxu0 0.0
        %1832 = vmatpush1.msra.mxu0 0.0
        %1833 = vmatprep.subr.mxu0 0.0
        %1834 = vmatpush1.msra.mxu0 0.0
        %1835 = vmatprep.subr.mxu0 0.0
        %1836 = vmatpush1.msra.mxu0 0.0
        %1837 = vmatprep.subr.mxu0 0.0
        %1838 = vmatpush1.msra.mxu0 0.0
        %1839 = vmatprep.subr.mxu0 0.0
        %1840 = vmatpush1.msra.mxu0 0.0
        %1841 = vmatprep.subr.mxu0 0.0
        %1842 = vmatpush1.msra.mxu0 0.0
        %1843 = vmatprep.subr.mxu0 0.0
        %1844 = vmatpush1.msra.mxu0 0.0
        %1845 = vmatprep.subr.mxu0 0.0
        %1846 = vmatpush1.msra.mxu0 0.0
        %1847 = vmatprep.subr.mxu0 0.0
        %1848 = vmatpush1.msra.mxu0 0.0
        %1849 = vmatprep.subr.mxu0 0.0
        %1850 = vmatpush1.msra.mxu0 0.0
        %1851 = vmatprep.subr.mxu0 0.0
        %1852 = vmatpush1.msra.mxu0 0.0
        %1853 = vmatprep.subr.mxu0 0.0
        %1854 = vmatpush1.msra.mxu0 0.0
        %1855 = vmatprep.subr.mxu0 0.0
        %1856 = vmatpush1.msra.mxu0 0.0
        %1857 = vmatprep.subr.mxu0 0.0
        %1858 = vmatpush1.msra.mxu0 0.0
        %1859 = vmatprep.subr.mxu0 0.0
        %1860 = vmatpush1.msra.mxu0 0.0
        %1861 = vmatprep.subr.mxu0 0.0
        %1862 = vmatpush1.msra.mxu0 0.0
        %1863 = vmatprep.subr.mxu0 0.0
        %1864 = vmatpush1.msra.mxu0 0.0
        %1865 = vmatprep.subr.mxu0 0.0
        %1866 = vmatpush1.msra.mxu0 0.0
        %1867 = vmatprep.subr.mxu0 0.0
        %1868 = vmatpush1.msra.mxu0 0.0
        %1869 = vmatprep.subr.mxu0 0.0
        %1870 = vmatpush1.msra.mxu0 0.0
        %1871 = vmatprep.subr.mxu0 0.0
        %1872 = vmatpush1.msra.mxu0 0.0
        %1873 = vmatprep.subr.mxu0 0.0
        %1874 = vmatpush1.msra.mxu0 0.0
        %1875 = vmatprep.subr.mxu0 0.0
        %1876 = vmatpush1.msra.mxu0 0.0
        %1877 = vmatprep.subr.mxu0 0.0
        %1878 = vmatpush1.msra.mxu0 0.0
        %1879 = vmatprep.subr.mxu0 0.0
        %1880 = vmatpush1.msra.mxu0 0.0
        %1881 = vmatprep.subr.mxu0 0.0
        %1882 = vmatpush1.msra.mxu0 0.0
        %1883 = vmatprep.subr.mxu0 0.0
        %1884 = vmatpush1.msra.mxu0 0.0
        %1885 = vmatprep.mubr.f32.mxu0 0.0
        %v1886 = vand.u32 %v1386, 4294901760
        %1887 = vmatmul.mubr.f32.gmra.mrb[0].mxu0 %v1886
        %v1888 = vpop.f32.mrb[0].mxu0
        %v1889 = vadd.f32 %v1784, %v1888
        %v1890 = vpop.f32.mrb[0].mxu0
        %v1891 = vadd.f32 %v1786, %v1890
        %1892 = vmatprep.mubr.f32.mxu0 0.0
        %v1893 = vand.u32 %v1389, 4294901760
        %1894 = vmatmul.mubr.f32.gmra.mrb[0].mxu0 %v1893
        %v1895 = vpop.f32.mrb[0].mxu0
        %v1896 = vadd.f32 %v1793, %v1895
        %v1897 = vpop.f32.mrb[0].mxu0
        %v1898 = vadd.f32 %v1795, %v1897
        %1899 = vmatprep.mubr.f32.mxu0 0.0
        %v1900 = vand.u32 %v1392, 4294901760
        %1901 = vmatmul.mubr.f32.gmra.mrb[0].mxu0 %v1900
        %v1902 = vpop.f32.mrb[0].mxu0
        %v1903 = vadd.f32 %v1802, %v1902
        %v1904 = vpop.f32.mrb[0].mxu0
        %v1905 = vadd.f32 %v1804, %v1904
        %1906 = vmatprep.mubr.f32.mxu0 0.0
        %v1907 = vand.u32 %v1395, 4294901760
        %1908 = vmatmul.mubr.f32.gmra.mrb[0].mxu0 %v1907
        %v1909 = vpop.f32.mrb[0].mxu0
        %v1910 = vadd.f32 %v1811, %v1909
        %v1911 = vpop.f32.mrb[0].mxu0
        %v1912 = vadd.f32 %v1813, %v1911
        %1913 = vdwg.mxu0
        %v1914 = vand.u32 %v1364, 4294901760
        %1915 = vmatprep.subr.mxu0 %v1914
        %v1916 = vand.u32 %v1363, 4294901760
        %1917 = vmatpush1.msra.mxu0 %v1916
        %1918 = vmatprep.subr.mxu0 0.0
        %1919 = vmatpush1.msra.mxu0 0.0
        %1920 = vmatprep.subr.mxu0 0.0
        %1921 = vmatpush1.msra.mxu0 0.0
        %1922 = vmatprep.subr.mxu0 0.0
        %1923 = vmatpush1.msra.mxu0 0.0
        %1924 = vmatprep.subr.mxu0 0.0
        %1925 = vmatpush1.msra.mxu0 0.0
        %1926 = vmatprep.subr.mxu0 0.0
        %1927 = vmatpush1.msra.mxu0 0.0
        %1928 = vmatprep.subr.mxu0 0.0
        %1929 = vmatpush1.msra.mxu0 0.0
        %1930 = vmatprep.subr.mxu0 0.0
        %1931 = vmatpush1.msra.mxu0 0.0
        %1932 = vmatprep.subr.mxu0 0.0
        %1933 = vmatpush1.msra.mxu0 0.0
        %1934 = vmatprep.subr.mxu0 0.0
        %1935 = vmatpush1.msra.mxu0 0.0
        %1936 = vmatprep.subr.mxu0 0.0
        %1937 = vmatpush1.msra.mxu0 0.0
        %1938 = vmatprep.subr.mxu0 0.0
        %1939 = vmatpush1.msra.mxu0 0.0
        %1940 = vmatprep.subr.mxu0 0.0
        %1941 = vmatpush1.msra.mxu0 0.0
        %1942 = vmatprep.subr.mxu0 0.0
        %1943 = vmatpush1.msra.mxu0 0.0
        %1944 = vmatprep.subr.mxu0 0.0
        %1945 = vmatpush1.msra.mxu0 0.0
        %1946 = vmatprep.subr.mxu0 0.0
        %1947 = vmatpush1.msra.mxu0 0.0
        %1948 = vmatprep.subr.mxu0 0.0
        %1949 = vmatpush1.msra.mxu0 0.0
        %1950 = vmatprep.subr.mxu0 0.0
        %1951 = vmatpush1.msra.mxu0 0.0
        %1952 = vmatprep.subr.mxu0 0.0
        %1953 = vmatpush1.msra.mxu0 0.0
        %1954 = vmatprep.subr.mxu0 0.0
        %1955 = vmatpush1.msra.mxu0 0.0
        %1956 = vmatprep.subr.mxu0 0.0
        %1957 = vmatpush1.msra.mxu0 0.0
        %1958 = vmatprep.subr.mxu0 0.0
        %1959 = vmatpush1.msra.mxu0 0.0
        %1960 = vmatprep.subr.mxu0 0.0
        %1961 = vmatpush1.msra.mxu0 0.0
        %1962 = vmatprep.subr.mxu0 0.0
        %1963 = vmatpush1.msra.mxu0 0.0
        %1964 = vmatprep.subr.mxu0 0.0
        %1965 = vmatpush1.msra.mxu0 0.0
        %1966 = vmatprep.subr.mxu0 0.0
        %1967 = vmatpush1.msra.mxu0 0.0
        %1968 = vmatprep.subr.mxu0 0.0
        %1969 = vmatpush1.msra.mxu0 0.0
        %1970 = vmatprep.subr.mxu0 0.0
        %1971 = vmatpush1.msra.mxu0 0.0
        %1972 = vmatprep.subr.mxu0 0.0
        %1973 = vmatpush1.msra.mxu0 0.0
        %1974 = vmatprep.subr.mxu0 0.0
        %1975 = vmatpush1.msra.mxu0 0.0
        %1976 = vmatprep.subr.mxu0 0.0
        %1977 = vmatpush1.msra.mxu0 0.0
        %1978 = vmatprep.subr.mxu0 0.0
        %1979 = vmatpush1.msra.mxu0 0.0
        %1980 = vmatprep.mubr.f32.mxu0 0.0
        %v1981 = vand.u32 %v1386, 4294901760
        %1982 = vmatmul.mubr.f32.gmra.mrb[0].mxu0 %v1981
        %v1983 = vpop.f32.mrb[0].mxu0
        %v1984 = vadd.f32 %v1889, %v1983
        %v1985 = vpop.f32.mrb[0].mxu0
        %v1986 = vadd.f32 %v1891, %v1985
        %1987 = vmatprep.mubr.f32.mxu0 0.0
        %v1988 = vand.u32 %v1389, 4294901760
        %1989 = vmatmul.mubr.f32.gmra.mrb[0].mxu0 %v1988
        %v1990 = vpop.f32.mrb[0].mxu0
        %v1991 = vadd.f32 %v1896, %v1990
        %v1992 = vpop.f32.mrb[0].mxu0
        %v1993 = vadd.f32 %v1898, %v1992
        %1994 = vmatprep.mubr.f32.mxu0 0.0
        %v1995 = vand.u32 %v1392, 4294901760
        %1996 = vmatmul.mubr.f32.gmra.mrb[0].mxu0 %v1995
        %v1997 = vpop.f32.mrb[0].mxu0
        %v1998 = vadd.f32 %v1903, %v1997
        %v1999 = vpop.f32.mrb[0].mxu0
        %v2000 = vadd.f32 %v1905, %v1999
        %2001 = vmatprep.mubr.f32.mxu0 0.0
        %v2002 = vand.u32 %v1395, 4294901760
        %2003 = vmatmul.mubr.f32.gmra.mrb[0].mxu0 %v2002
        %v2004 = vpop.f32.mrb[0].mxu0
        %v2005 = vadd.f32 %v1910, %v2004
        %v2006 = vpop.f32.mrb[0].mxu0
        %v2007 = vadd.f32 %v1912, %v2006
        %2008 = vdwg.mxu0
        %v2009 = vadd.f32 %v1984, %v267
        %v2010 = vadd.f32 %v1986, %v268
        %v2011 = vadd.f32 %v1991, %v269
        %v2012 = vadd.f32 %v1993, %v270
        %v2013 = vadd.f32 %v1998, %v271
        %v2014 = vadd.f32 %v2000, %v272
        %v2015 = vadd.f32 %v2005, %v273
        %v2016 = vadd.f32 %v2007, %v274
        %v2017 = vmax.f32 %v2009, 0.0
        %v2018 = vmax.f32 %v2010, 0.0
        %v2019 = vmax.f32 %v2011, 0.0
        %v2020 = vmax.f32 %v2012, 0.0
        %v2021 = vmax.f32 %v2013, 0.0
        %v2022 = vmax.f32 %v2014, 0.0
        %v2023 = vmax.f32 %v2015, 0.0
        %v2024 = vmax.f32 %v2016, 0.0
        %2025 = vst [vmem:[%s260] sm:$0xff] %v2017
        %2026 = vst [vmem:[%s260 + $0x8] sm:$0xff] %v2018
        %2027 = vst [vmem:[%s260 + $0x10] sm:$0xff] %v2019
        %2028 = vst [vmem:[%s260 + $0x18] sm:$0xff] %v2020
        %2029 = vst [vmem:[%s260 + $0x20] sm:$0xff] %v2021
        %2030 = vst [vmem:[%s260 + $0x28] sm:$0xff] %v2022
        %2031 = vst [vmem:[%s260 + $0x30] sm:$0xff] %v2023
        %2032 = vst [vmem:[%s260 + $0x38] sm:$0xff] %v2024
        %s2033 = sand.u32 %s156, 1
        %s2034 = scalar_lea.sflag [#allocation4], %s2033
        %s2035 = sand.u32 %s156, 1
        %s2036 = smul.addr %s2035, 64
        %s2037 = scalar_lea.vmem [#allocation5], %s2036
        // Predicated region
        $region45: #{tpu_custom_call.1} parent=39 // pred_check
          %p2038 = pneg %p166
        $region46: #{tpu_custom_call.1} parent=39 // pred_check_branch
          %2040 = sbr.rel (%p2038) target = $region48
        $region47: #{tpu_custom_call.1} parent=39 // pred_region
          %s2041 = smul.u32 2, %s27
          %s2043 = ssub.s32 1024, 1024
          %2044 = vsyncadd %s2034, %s2043
          %s2045 = smul.addr %s26, 8
          %s2046 = sadd.s32 %s2041, %s2045
          %s2047 = smul.addr %s2046, 128
          %s2048 = scalar_lea.hbm %s5, %s2047
          %s2049 = sshll.u32 %s2037, 4
          %s2050 = int_to_ptr.vmem [resolvable:$true] %s2049
          %2055 = dma.vmem_to_hbm [thread:$0]  %s2050, 1024, %s2048, %s2034, 256, 256, 16
        $region48: #{tpu_custom_call.1} parent=39 // pred_fallthru
          _
      $region40: #{tpu_custom_call.1} parent=5 // pred_fallthru
        _
      %p2056 = scmp.le.s32.totalorder 2, %s17
      // Predicated region
      $region49: #{tpu_custom_call.1} parent=5 // pred_check
        %p2057 = pneg %p2056
      $region50: #{tpu_custom_call.1} parent=5 // pred_check_branch
        %2059 = sbr.rel (%p2057) target = $region52
      $region51: #{tpu_custom_call.1} parent=5 // pred_region
        %s2060 = ssub.s32 %s17, 2
        // Predicated region
        $region53: #{tpu_custom_call.1} parent=51 // pred_check
          %p2061 = pneg %p172
        $region54: #{tpu_custom_call.1} parent=51 // pred_check_branch
          %2063 = sbr.rel (%p2061) target = $region56
        $region55: #{tpu_custom_call.1} parent=51 // pred_region
          %s2064 = sand.u32 %s157, 1
          %s2065 = scalar_lea.sflag [#allocation4], %s2064
          %s2066 = sand.u32 %s157, 1
          %s2067 = smul.addr %s2066, 64
          %s2068 = scalar_lea.vmem [#allocation5], %s2067
          %2069 = dma.done %s2065, 1024
        $region56: #{tpu_custom_call.1} parent=51 // pred_fallthru
          _
      $region52: #{tpu_custom_call.1} parent=5 // pred_fallthru
        _
    $region6: #{tpu_custom_call.1} parent=1 // loop_footer
      %s21 = sadd.s32 1, %s17
    $region7: #{tpu_custom_call.1} parent=1 // loop_footer_branch
      %16 = sbr.rel target = $region3
    $region8: #{tpu_custom_call.1} parent=1 // loop_exit
      _
    %2070 = vsyncpa [#allocation3], 1
    %s2071 = scalar_lea.sflag [#allocation3], 1
    %2072 = vsyncpa %s2071, 1
    %2073 = vsyncpa [#allocation4], 1
    %s2074 = scalar_lea.sflag [#allocation4], 1
    %2075 = vsyncpa %s2074, 1

</llo_original>
